<compile_context>
chip_gen: v6e
topology: v6e:2x2x1
jax: 0.10.0
libtpu: 0.0.40
codegen_flags: <defaults>
</compile_context>

<pallas_src>
import functools

import numpy as np

import jax
import jax.numpy as jnp
from jax import lax
from jax.experimental import pallas as pl
from jax.experimental.pallas import tpu as pltpu

K = 7   # conv kernel size
P = 3   # conv padding ("same")


def _round_up(v, m):
    return (v + m - 1) // m * m


def _channel_chunk(C, cap=32):
    """Channels streamed per inner-loop step: prefer large, 8-aligned divisors."""
    if C <= cap:
        return C
    if C % 8 == 0:
        best = 0
        for cc in range(8, cap + 1, 8):
            if C % cc == 0:
                best = cc
        if best:
            return best
    for cc in range(cap, 0, -1):
        if C % cc == 0:
            return cc
    return 1


def sam_kernel(w_ref, m_ref, x_ref, o_ref, *, C, H, W, HW, HWx, HWd, CC, NC):
    # w_ref : SMEM (2*K*K,) f32   conv weights, (in_channel, kh, kw) row-major
    # m_ref : VMEM (K, HWd) f32   column-wrap masks (one per kw offset)
    # x_ref : VMEM (C, HWx)       lane-dense feature map for this batch element
    # o_ref : VMEM (C, HWx)       output block
    inv_c = jnp.float32(1.0 / C)

    # ---- 1. channel-wise max / mean, streamed over aligned channel chunks ----
    if NC == 1:
        xf = x_ref[...].astype(jnp.float32)                        # (C, HWx)
        mx = jnp.max(xf, axis=0, keepdims=True)                    # (1, HWx)
        sm = jnp.sum(xf, axis=0, keepdims=True)                    # (1, HWx)
    else:
        x0 = x_ref[pl.ds(0, CC), :].astype(jnp.float32)            # (CC, HWx)

        def red_body(i, carry):
            mxc, smc = carry
            s = i * CC
            if CC % 8 == 0:
                s = pl.multiple_of(s, 8)
            xc = x_ref[pl.ds(s, CC), :].astype(jnp.float32)
            return jnp.maximum(mxc, xc), smc + xc

        mxc, smc = lax.fori_loop(1, NC, red_body, (x0, x0),
                                 unroll=min(NC - 1, 8))
        mx = jnp.max(mxc, axis=0, keepdims=True)                   # (1, HWx)
        sm = jnp.sum(smc, axis=0, keepdims=True)                   # (1, HWx)
    avg = sm * inv_c                                               # (1, HWx)

    # ---- 2. extend the descriptors with a zero tail (>= P*W + P zeros) ----
    # Out-of-image row taps (top/bottom) then roll into zeros automatically,
    # so the only masks needed are the 7 per-column (left/right wrap) masks.
    # Positions [HW, HWx) are already zero because x is zero-padded there.
    if HWd > HWx:
        tail = jnp.zeros((1, HWd - HWx), jnp.float32)
        mxd = jnp.concatenate([mx, tail], axis=1)                  # (1, HWd)
        avgd = jnp.concatenate([avg, tail], axis=1)                # (1, HWd)
    else:
        mxd, avgd = mx, avg

    # ---- 3. fully-unrolled 7x7 conv via lane rolls + column masks ----
    col_masks = [m_ref[pl.ds(kw, 1), :] for kw in range(K)]        # 7 x (1, HWd)

    acc = jnp.zeros((1, HWd), jnp.float32)
    for kh in range(K):
        dh = kh - P
        for kw in range(K):
            dw = kw - P
            off = dh * W + dw
            shift = (-off) % HWd
            w0 = w_ref[kh * K + kw]                                # SMEM scalar (max map)
            w1 = w_ref[K * K + kh * K + kw]                        # SMEM scalar (mean map)
            if shift == 0:
                r0, r1 = mxd, avgd
            else:
                r0 = pltpu.roll(mxd, shift=shift, axis=1)
                r1 = pltpu.roll(avgd, shift=shift, axis=1)
            acc = acc + (w0 * r0 + w1 * r1) * col_masks[kw]

    att = jax.nn.sigmoid(acc[:, :HWx])                             # (1, HWx) f32
    att_c = att.astype(x_ref.dtype)                                # multiply in input dtype

    # ---- 4. out = att * x, streamed over channel chunks (lane-dense stores) ----
    if NC == 1:
        o_ref[...] = x_ref[...] * att_c
    else:
        att_b = jnp.broadcast_to(att_c, (CC, HWx))                 # hoisted broadcast

        def mul_body(i, carry):
            s = i * CC
            if CC % 8 == 0:
                s = pl.multiple_of(s, 8)
            o_ref[pl.ds(s, CC), :] = x_ref[pl.ds(s, CC), :] * att_b
            return carry

        lax.fori_loop(0, NC, mul_body, 0, unroll=min(NC, 8))


def sam_forward(x, w):
    """x: (N, C, H, W), w: (1, 2, K, K).  Returns sigmoid(conv([max;mean])) * x."""
    N, C, H, W_ = x.shape
    HW = H * W_
    HWx = _round_up(HW, 128)                    # lane-dense x / out layout
    HWd = _round_up(HW + P * W_ + P, 128)       # descriptor length incl. zero tail

    CC = _channel_chunk(C)
    NC = C // CC

    x_flat = x.reshape(N, C, HW)                # free: contiguous reshape
    if HWx != HW:
        x_flat = jnp.pad(x_flat, ((0, 0), (0, 0), (0, HWx - HW)))
    w_flat = w.reshape(-1).astype(jnp.float32)  # (2*K*K,), (in, kh, kw) row-major

    # Column-wrap masks (pure shape functions -> host-side constants).
    pos = np.arange(HWd)
    col = pos % W_
    in_image = pos < HW
    cmask = np.zeros((K, HWd), np.float32)
    for kw in range(K):
        dw = kw - P
        cmask[kw] = (in_image & (col + dw >= 0) & (col + dw < W_)).astype(np.float32)
    cmask = jnp.asarray(cmask)

    # Generation-aware VMEM budget (v5e/v6e: 128 MiB, v7x: 64 MiB per core).
    try:
        info = pltpu.get_tpu_info()
        vmem_cap = int(getattr(info, "vmem_capacity_bytes", 64 << 20))
    except Exception:  # conservative fallback valid on every generation
        vmem_cap = 64 << 20
    budget = vmem_cap * 3 // 4

    blk_bytes = C * HWx * x.dtype.itemsize
    live_bytes = (4 * blk_bytes                 # double-buffered in + out blocks
                  + 2 * K * HWd * 4             # mask input (double-buffered)
                  + 16 * HWd * 4                # descriptors / acc / rolled temps
                  + (4 * CC + C) * HWx * 4      # reduce carries + f32 temps
                  + (2 << 20))                  # slack
    # TODO(synk): if live_bytes exceeds the budget (very large C*H*W on v7x),
    # tile over spatial row blocks with a P-row halo instead of one (C, HW) block.
    vmem_limit = int(min(max(live_bytes, 32 << 20), budget))

    kernel = functools.partial(sam_kernel, C=C, H=H, W=W_, HW=HW,
                               HWx=HWx, HWd=HWd, CC=CC, NC=NC)

    out_flat = pl.pallas_call(
        kernel,
        out_shape=jax.ShapeDtypeStruct((N, C, HWx), x.dtype),
        grid=(N,),
        in_specs=[
            pl.BlockSpec(memory_space=pltpu.MemorySpace.SMEM),      # conv weights
            pl.BlockSpec((K, HWd), lambda n: (0, 0)),               # column masks
            pl.BlockSpec((None, C, HWx), lambda n: (n, 0, 0)),      # x (lane-dense)
        ],
        out_specs=pl.BlockSpec((None, C, HWx), lambda n: (n, 0, 0)),
        compiler_params=pltpu.CompilerParams(
            dimension_semantics=("parallel",),
            vmem_limit_bytes=vmem_limit,
        ),
    )(w_flat, cmask, x_flat)

    if HWx != HW:
        out_flat = out_flat[:, :, :HW]
    return out_flat.reshape(N, C, H, W_)


def sam_reference(x, w):
    """Pure-JAX reference matching the PyTorch module."""
    mx = jnp.max(x, axis=1, keepdims=True)
    avg = jnp.mean(x, axis=1, keepdims=True)
    concat = jnp.concatenate([mx, avg], axis=1)
    out = jax.lax.conv_general_dilated(
        concat, w, window_strides=(1, 1), padding=((P, P), (P, P)),
        dimension_numbers=("NCHW", "OIHW", "NCHW"))
    return jax.nn.sigmoid(out) * x


if __name__ == "__main__":
    key = jax.random.PRNGKey(0)
    kx, kw = jax.random.split(key)

    N, C, H, W = 2, 4, 16, 16
    x = jax.random.normal(kx, (N, C, H, W), dtype=jnp.float32)
    # Conv2d(2, 1, 7, bias=False) weight -> (1, 2, 7, 7).
    w = jax.random.normal(kw, (1, 2, K, K), dtype=jnp.float32) * 0.05

    out = jax.block_until_ready(sam_forward(x, w))

    ref = sam_reference(x, w)
    assert out.shape == (N, C, H, W)
    assert jnp.allclose(out, ref, atol=1e-5, rtol=1e-5), "Pallas SAM mismatch vs reference"

    print("KERNEL_OK")
</pallas_src>

<mosaic_0001>
module attributes {stable_mosaic.version = 11 : i64} {
  func.func @sam_kernel(%arg0: i32, %arg1: memref<98xf32, #tpu.memory_space<smem>>, %arg2: memref<7x384xf32, #tpu.memory_space<vmem>>, %arg3: memref<1x4x256xf32, #tpu.memory_space<vmem>>, %arg4: memref<1x4x256xf32, #tpu.memory_space<vmem>>) attributes {dimension_semantics = [#tpu.dimension_semantics<parallel>], iteration_bounds = array<i64: 2>, scalar_prefetch = 0 : i64, scratch_operands = 0 : i64, tpu.core_type = #tpu.core_type<tc>, window_params = [{transform_indices = @transform_0, window_bounds = array<i64: 98>}, {pipeline_mode = #tpu.pipeline_mode<synchronous>, transform_indices = @transform_1, window_bounds = array<i64: 7, 384>}, {transform_indices = @transform_2, window_bounds = array<i64: 1, 4, 256>}, {transform_indices = @transform_3, window_bounds = array<i64: 1, 4, 256>}]} {
    %c0 = arith.constant 0 : index
    %c0_0 = arith.constant 0 : index
    %c0_1 = arith.constant 0 : index
    %0 = vector.load %arg3[%c0, %c0_0, %c0_1] : memref<1x4x256xf32, #tpu.memory_space<vmem>>, vector<1x4x256xf32>
    %1 = vector.shape_cast %0 : vector<1x4x256xf32> to vector<4x256xf32>
    %cst = arith.constant dense<0xFF800000> : vector<256xf32>
    %2 = vector.multi_reduction <maximumf>, %1, %cst [0] : vector<4x256xf32> to vector<256xf32>
    %3 = vector.shape_cast %2 : vector<256xf32> to vector<1x256xf32>
    %cst_2 = arith.constant dense<0.000000e+00> : vector<256xf32>
    %4 = vector.multi_reduction <add>, %1, %cst_2 [0] : vector<4x256xf32> to vector<256xf32>
    %5 = vector.shape_cast %4 : vector<256xf32> to vector<1x256xf32>
    %cst_3 = arith.constant 2.500000e-01 : f32
    %6 = vector.broadcast %cst_3 : f32 to vector<1x256xf32>
    %7 = arith.mulf %5, %6 : vector<1x256xf32>
    %cst_4 = arith.constant 0.000000e+00 : f32
    %8 = vector.broadcast %cst_4 : f32 to vector<1x128xf32>
    %9 = tpu.concatenate %3, %8 in 1 : vector<1x256xf32>, vector<1x128xf32> -> vector<1x384xf32>
    %10 = tpu.concatenate %7, %8 in 1 : vector<1x256xf32>, vector<1x128xf32> -> vector<1x384xf32>
    %c0_5 = arith.constant 0 : index
    %c0_6 = arith.constant 0 : index
    %11 = vector.load %arg2[%c0_5, %c0_6] : memref<7x384xf32, #tpu.memory_space<vmem>>, vector<1x384xf32>
    %c1 = arith.constant 1 : index
    %c0_7 = arith.constant 0 : index
    %12 = vector.load %arg2[%c1, %c0_7] : memref<7x384xf32, #tpu.memory_space<vmem>>, vector<1x384xf32>
    %c2 = arith.constant 2 : index
    %c0_8 = arith.constant 0 : index
    %13 = vector.load %arg2[%c2, %c0_8] : memref<7x384xf32, #tpu.memory_space<vmem>>, vector<1x384xf32>
    %c3 = arith.constant 3 : index
    %c0_9 = arith.constant 0 : index
    %14 = vector.load %arg2[%c3, %c0_9] : memref<7x384xf32, #tpu.memory_space<vmem>>, vector<1x384xf32>
    %c4 = arith.constant 4 : index
    %c0_10 = arith.constant 0 : index
    %15 = vector.load %arg2[%c4, %c0_10] : memref<7x384xf32, #tpu.memory_space<vmem>>, vector<1x384xf32>
    %c5 = arith.constant 5 : index
    %c0_11 = arith.constant 0 : index
    %16 = vector.load %arg2[%c5, %c0_11] : memref<7x384xf32, #tpu.memory_space<vmem>>, vector<1x384xf32>
    %c6 = arith.constant 6 : index
    %c0_12 = arith.constant 0 : index
    %17 = vector.load %arg2[%c6, %c0_12] : memref<7x384xf32, #tpu.memory_space<vmem>>, vector<1x384xf32>
    %cst_13 = arith.constant 0.000000e+00 : f32
    %18 = vector.broadcast %cst_13 : f32 to vector<1x384xf32>
    %c0_14 = arith.constant 0 : index
    %19 = memref.load %arg1[%c0_14] : memref<98xf32, #tpu.memory_space<smem>>
    %c49 = arith.constant 49 : index
    %20 = memref.load %arg1[%c49] : memref<98xf32, #tpu.memory_space<smem>>
    %c51_i32 = arith.constant 51 : i32
    %21 = tpu.dynamic_rotate %9 by %c51_i32 dim 1 : vector<1x384xf32>, i32 -> vector<1x384xf32>
    %c51_i32_15 = arith.constant 51 : i32
    %22 = tpu.dynamic_rotate %10 by %c51_i32_15 dim 1 : vector<1x384xf32>, i32 -> vector<1x384xf32>
    %23 = vector.broadcast %19 : f32 to vector<1x384xf32>
    %24 = arith.mulf %23, %21 : vector<1x384xf32>
    %25 = vector.broadcast %20 : f32 to vector<1x384xf32>
    %26 = arith.mulf %25, %22 : vector<1x384xf32>
    %27 = arith.addf %24, %26 : vector<1x384xf32>
    %28 = arith.mulf %27, %11 : vector<1x384xf32>
    %29 = arith.addf %18, %28 : vector<1x384xf32>
    %c1_16 = arith.constant 1 : index
    %30 = memref.load %arg1[%c1_16] : memref<98xf32, #tpu.memory_space<smem>>
    %c50 = arith.constant 50 : index
    %31 = memref.load %arg1[%c50] : memref<98xf32, #tpu.memory_space<smem>>
    %c50_i32 = arith.constant 50 : i32
    %32 = tpu.dynamic_rotate %9 by %c50_i32 dim 1 : vector<1x384xf32>, i32 -> vector<1x384xf32>
    %c50_i32_17 = arith.constant 50 : i32
    %33 = tpu.dynamic_rotate %10 by %c50_i32_17 dim 1 : vector<1x384xf32>, i32 -> vector<1x384xf32>
    %34 = vector.broadcast %30 : f32 to vector<1x384xf32>
    %35 = arith.mulf %34, %32 : vector<1x384xf32>
    %36 = vector.broadcast %31 : f32 to vector<1x384xf32>
    %37 = arith.mulf %36, %33 : vector<1x384xf32>
    %38 = arith.addf %35, %37 : vector<1x384xf32>
    %39 = arith.mulf %38, %12 : vector<1x384xf32>
    %40 = arith.addf %29, %39 : vector<1x384xf32>
    %c2_18 = arith.constant 2 : index
    %41 = memref.load %arg1[%c2_18] : memref<98xf32, #tpu.memory_space<smem>>
    %c51 = arith.constant 51 : index
    %42 = memref.load %arg1[%c51] : memref<98xf32, #tpu.memory_space<smem>>
    %c49_i32 = arith.constant 49 : i32
    %43 = tpu.dynamic_rotate %9 by %c49_i32 dim 1 : vector<1x384xf32>, i32 -> vector<1x384xf32>
    %c49_i32_19 = arith.constant 49 : i32
    %44 = tpu.dynamic_rotate %10 by %c49_i32_19 dim 1 : vector<1x384xf32>, i32 -> vector<1x384xf32>
    %45 = vector.broadcast %41 : f32 to vector<1x384xf32>
    %46 = arith.mulf %45, %43 : vector<1x384xf32>
    %47 = vector.broadcast %42 : f32 to vector<1x384xf32>
    %48 = arith.mulf %47, %44 : vector<1x384xf32>
    %49 = arith.addf %46, %48 : vector<1x384xf32>
    %50 = arith.mulf %49, %13 : vector<1x384xf32>
    %51 = arith.addf %40, %50 : vector<1x384xf32>
    %c3_20 = arith.constant 3 : index
    %52 = memref.load %arg1[%c3_20] : memref<98xf32, #tpu.memory_space<smem>>
    %c52 = arith.constant 52 : index
    %53 = memref.load %arg1[%c52] : memref<98xf32, #tpu.memory_space<smem>>
    %c48_i32 = arith.constant 48 : i32
    %54 = tpu.dynamic_rotate %9 by %c48_i32 dim 1 : vector<1x384xf32>, i32 -> vector<1x384xf32>
    %c48_i32_21 = arith.constant 48 : i32
    %55 = tpu.dynamic_rotate %10 by %c48_i32_21 dim 1 : vector<1x384xf32>, i32 -> vector<1x384xf32>
    %56 = vector.broadcast %52 : f32 to vector<1x384xf32>
    %57 = arith.mulf %56, %54 : vector<1x384xf32>
    %58 = vector.broadcast %53 : f32 to vector<1x384xf32>
    %59 = arith.mulf %58, %55 : vector<1x384xf32>
    %60 = arith.addf %57, %59 : vector<1x384xf32>
    %61 = arith.mulf %60, %14 : vector<1x384xf32>
    %62 = arith.addf %51, %61 : vector<1x384xf32>
    %c4_22 = arith.constant 4 : index
    %63 = memref.load %arg1[%c4_22] : memref<98xf32, #tpu.memory_space<smem>>
    %c53 = arith.constant 53 : index
    %64 = memref.load %arg1[%c53] : memref<98xf32, #tpu.memory_space<smem>>
    %c47_i32 = arith.constant 47 : i32
    %65 = tpu.dynamic_rotate %9 by %c47_i32 dim 1 : vector<1x384xf32>, i32 -> vector<1x384xf32>
    %c47_i32_23 = arith.constant 47 : i32
    %66 = tpu.dynamic_rotate %10 by %c47_i32_23 dim 1 : vector<1x384xf32>, i32 -> vector<1x384xf32>
    %67 = vector.broadcast %63 : f32 to vector<1x384xf32>
    %68 = arith.mulf %67, %65 : vector<1x384xf32>
    %69 = vector.broadcast %64 : f32 to vector<1x384xf32>
    %70 = arith.mulf %69, %66 : vector<1x384xf32>
    %71 = arith.addf %68, %70 : vector<1x384xf32>
    %72 = arith.mulf %71, %15 : vector<1x384xf32>
    %73 = arith.addf %62, %72 : vector<1x384xf32>
    %c5_24 = arith.constant 5 : index
    %74 = memref.load %arg1[%c5_24] : memref<98xf32, #tpu.memory_space<smem>>
    %c54 = arith.constant 54 : index
    %75 = memref.load %arg1[%c54] : memref<98xf32, #tpu.memory_space<smem>>
    %c46_i32 = arith.constant 46 : i32
    %76 = tpu.dynamic_rotate %9 by %c46_i32 dim 1 : vector<1x384xf32>, i32 -> vector<1x384xf32>
    %c46_i32_25 = arith.constant 46 : i32
    %77 = tpu.dynamic_rotate %10 by %c46_i32_25 dim 1 : vector<1x384xf32>, i32 -> vector<1x384xf32>
    %78 = vector.broadcast %74 : f32 to vector<1x384xf32>
    %79 = arith.mulf %78, %76 : vector<1x384xf32>
    %80 = vector.broadcast %75 : f32 to vector<1x384xf32>
    %81 = arith.mulf %80, %77 : vector<1x384xf32>
    %82 = arith.addf %79, %81 : vector<1x384xf32>
    %83 = arith.mulf %82, %16 : vector<1x384xf32>
    %84 = arith.addf %73, %83 : vector<1x384xf32>
    %c6_26 = arith.constant 6 : index
    %85 = memref.load %arg1[%c6_26] : memref<98xf32, #tpu.memory_space<smem>>
    %c55 = arith.constant 55 : index
    %86 = memref.load %arg1[%c55] : memref<98xf32, #tpu.memory_space<smem>>
    %c45_i32 = arith.constant 45 : i32
    %87 = tpu.dynamic_rotate %9 by %c45_i32 dim 1 : vector<1x384xf32>, i32 -> vector<1x384xf32>
    %c45_i32_27 = arith.constant 45 : i32
    %88 = tpu.dynamic_rotate %10 by %c45_i32_27 dim 1 : vector<1x384xf32>, i32 -> vector<1x384xf32>
    %89 = vector.broadcast %85 : f32 to vector<1x384xf32>
    %90 = arith.mulf %89, %87 : vector<1x384xf32>
    %91 = vector.broadcast %86 : f32 to vector<1x384xf32>
    %92 = arith.mulf %91, %88 : vector<1x384xf32>
    %93 = arith.addf %90, %92 : vector<1x384xf32>
    %94 = arith.mulf %93, %17 : vector<1x384xf32>
    %95 = arith.addf %84, %94 : vector<1x384xf32>
    %c7 = arith.constant 7 : index
    %96 = memref.load %arg1[%c7] : memref<98xf32, #tpu.memory_space<smem>>
    %c56 = arith.constant 56 : index
    %97 = memref.load %arg1[%c56] : memref<98xf32, #tpu.memory_space<smem>>
    %c35_i32 = arith.constant 35 : i32
    %98 = tpu.dynamic_rotate %9 by %c35_i32 dim 1 : vector<1x384xf32>, i32 -> vector<1x384xf32>
    %c35_i32_28 = arith.constant 35 : i32
    %99 = tpu.dynamic_rotate %10 by %c35_i32_28 dim 1 : vector<1x384xf32>, i32 -> vector<1x384xf32>
    %100 = vector.broadcast %96 : f32 to vector<1x384xf32>
    %101 = arith.mulf %100, %98 : vector<1x384xf32>
    %102 = vector.broadcast %97 : f32 to vector<1x384xf32>
    %103 = arith.mulf %102, %99 : vector<1x384xf32>
    %104 = arith.addf %101, %103 : vector<1x384xf32>
    %105 = arith.mulf %104, %11 : vector<1x384xf32>
    %106 = arith.addf %95, %105 : vector<1x384xf32>
    %c8 = arith.constant 8 : index
    %107 = memref.load %arg1[%c8] : memref<98xf32, #tpu.memory_space<smem>>
    %c57 = arith.constant 57 : index
    %108 = memref.load %arg1[%c57] : memref<98xf32, #tpu.memory_space<smem>>
    %c34_i32 = arith.constant 34 : i32
    %109 = tpu.dynamic_rotate %9 by %c34_i32 dim 1 : vector<1x384xf32>, i32 -> vector<1x384xf32>
    %c34_i32_29 = arith.constant 34 : i32
    %110 = tpu.dynamic_rotate %10 by %c34_i32_29 dim 1 : vector<1x384xf32>, i32 -> vector<1x384xf32>
    %111 = vector.broadcast %107 : f32 to vector<1x384xf32>
    %112 = arith.mulf %111, %109 : vector<1x384xf32>
    %113 = vector.broadcast %108 : f32 to vector<1x384xf32>
    %114 = arith.mulf %113, %110 : vector<1x384xf32>
    %115 = arith.addf %112, %114 : vector<1x384xf32>
    %116 = arith.mulf %115, %12 : vector<1x384xf32>
    %117 = arith.addf %106, %116 : vector<1x384xf32>
    %c9 = arith.constant 9 : index
    %118 = memref.load %arg1[%c9] : memref<98xf32, #tpu.memory_space<smem>>
    %c58 = arith.constant 58 : index
    %119 = memref.load %arg1[%c58] : memref<98xf32, #tpu.memory_space<smem>>
    %c33_i32 = arith.constant 33 : i32
    %120 = tpu.dynamic_rotate %9 by %c33_i32 dim 1 : vector<1x384xf32>, i32 -> vector<1x384xf32>
    %c33_i32_30 = arith.constant 33 : i32
    %121 = tpu.dynamic_rotate %10 by %c33_i32_30 dim 1 : vector<1x384xf32>, i32 -> vector<1x384xf32>
    %122 = vector.broadcast %118 : f32 to vector<1x384xf32>
    %123 = arith.mulf %122, %120 : vector<1x384xf32>
    %124 = vector.broadcast %119 : f32 to vector<1x384xf32>
    %125 = arith.mulf %124, %121 : vector<1x384xf32>
    %126 = arith.addf %123, %125 : vector<1x384xf32>
    %127 = arith.mulf %126, %13 : vector<1x384xf32>
    %128 = arith.addf %117, %127 : vector<1x384xf32>
    %c10 = arith.constant 10 : index
    %129 = memref.load %arg1[%c10] : memref<98xf32, #tpu.memory_space<smem>>
    %c59 = arith.constant 59 : index
    %130 = memref.load %arg1[%c59] : memref<98xf32, #tpu.memory_space<smem>>
    %c32_i32 = arith.constant 32 : i32
    %131 = tpu.dynamic_rotate %9 by %c32_i32 dim 1 : vector<1x384xf32>, i32 -> vector<1x384xf32>
    %c32_i32_31 = arith.constant 32 : i32
    %132 = tpu.dynamic_rotate %10 by %c32_i32_31 dim 1 : vector<1x384xf32>, i32 -> vector<1x384xf32>
    %133 = vector.broadcast %129 : f32 to vector<1x384xf32>
    %134 = arith.mulf %133, %131 : vector<1x384xf32>
    %135 = vector.broadcast %130 : f32 to vector<1x384xf32>
    %136 = arith.mulf %135, %132 : vector<1x384xf32>
    %137 = arith.addf %134, %136 : vector<1x384xf32>
    %138 = arith.mulf %137, %14 : vector<1x384xf32>
    %139 = arith.addf %128, %138 : vector<1x384xf32>
    %c11 = arith.constant 11 : index
    %140 = memref.load %arg1[%c11] : memref<98xf32, #tpu.memory_space<smem>>
    %c60 = arith.constant 60 : index
    %141 = memref.load %arg1[%c60] : memref<98xf32, #tpu.memory_space<smem>>
    %c31_i32 = arith.constant 31 : i32
    %142 = tpu.dynamic_rotate %9 by %c31_i32 dim 1 : vector<1x384xf32>, i32 -> vector<1x384xf32>
    %c31_i32_32 = arith.constant 31 : i32
    %143 = tpu.dynamic_rotate %10 by %c31_i32_32 dim 1 : vector<1x384xf32>, i32 -> vector<1x384xf32>
    %144 = vector.broadcast %140 : f32 to vector<1x384xf32>
    %145 = arith.mulf %144, %142 : vector<1x384xf32>
    %146 = vector.broadcast %141 : f32 to vector<1x384xf32>
    %147 = arith.mulf %146, %143 : vector<1x384xf32>
    %148 = arith.addf %145, %147 : vector<1x384xf32>
    %149 = arith.mulf %148, %15 : vector<1x384xf32>
    %150 = arith.addf %139, %149 : vector<1x384xf32>
    %c12 = arith.constant 12 : index
    %151 = memref.load %arg1[%c12] : memref<98xf32, #tpu.memory_space<smem>>
    %c61 = arith.constant 61 : index
    %152 = memref.load %arg1[%c61] : memref<98xf32, #tpu.memory_space<smem>>
    %c30_i32 = arith.constant 30 : i32
    %153 = tpu.dynamic_rotate %9 by %c30_i32 dim 1 : vector<1x384xf32>, i32 -> vector<1x384xf32>
    %c30_i32_33 = arith.constant 30 : i32
    %154 = tpu.dynamic_rotate %10 by %c30_i32_33 dim 1 : vector<1x384xf32>, i32 -> vector<1x384xf32>
    %155 = vector.broadcast %151 : f32 to vector<1x384xf32>
    %156 = arith.mulf %155, %153 : vector<1x384xf32>
    %157 = vector.broadcast %152 : f32 to vector<1x384xf32>
    %158 = arith.mulf %157, %154 : vector<1x384xf32>
    %159 = arith.addf %156, %158 : vector<1x384xf32>
    %160 = arith.mulf %159, %16 : vector<1x384xf32>
    %161 = arith.addf %150, %160 : vector<1x384xf32>
    %c13 = arith.constant 13 : index
    %162 = memref.load %arg1[%c13] : memref<98xf32, #tpu.memory_space<smem>>
    %c62 = arith.constant 62 : index
    %163 = memref.load %arg1[%c62] : memref<98xf32, #tpu.memory_space<smem>>
    %c29_i32 = arith.constant 29 : i32
    %164 = tpu.dynamic_rotate %9 by %c29_i32 dim 1 : vector<1x384xf32>, i32 -> vector<1x384xf32>
    %c29_i32_34 = arith.constant 29 : i32
    %165 = tpu.dynamic_rotate %10 by %c29_i32_34 dim 1 : vector<1x384xf32>, i32 -> vector<1x384xf32>
    %166 = vector.broadcast %162 : f32 to vector<1x384xf32>
    %167 = arith.mulf %166, %164 : vector<1x384xf32>
    %168 = vector.broadcast %163 : f32 to vector<1x384xf32>
    %169 = arith.mulf %168, %165 : vector<1x384xf32>
    %170 = arith.addf %167, %169 : vector<1x384xf32>
    %171 = arith.mulf %170, %17 : vector<1x384xf32>
    %172 = arith.addf %161, %171 : vector<1x384xf32>
    %c14 = arith.constant 14 : index
    %173 = memref.load %arg1[%c14] : memref<98xf32, #tpu.memory_space<smem>>
    %c63 = arith.constant 63 : index
    %174 = memref.load %arg1[%c63] : memref<98xf32, #tpu.memory_space<smem>>
    %c19_i32 = arith.constant 19 : i32
    %175 = tpu.dynamic_rotate %9 by %c19_i32 dim 1 : vector<1x384xf32>, i32 -> vector<1x384xf32>
    %c19_i32_35 = arith.constant 19 : i32
    %176 = tpu.dynamic_rotate %10 by %c19_i32_35 dim 1 : vector<1x384xf32>, i32 -> vector<1x384xf32>
    %177 = vector.broadcast %173 : f32 to vector<1x384xf32>
    %178 = arith.mulf %177, %175 : vector<1x384xf32>
    %179 = vector.broadcast %174 : f32 to vector<1x384xf32>
    %180 = arith.mulf %179, %176 : vector<1x384xf32>
    %181 = arith.addf %178, %180 : vector<1x384xf32>
    %182 = arith.mulf %181, %11 : vector<1x384xf32>
    %183 = arith.addf %172, %182 : vector<1x384xf32>
    %c15 = arith.constant 15 : index
    %184 = memref.load %arg1[%c15] : memref<98xf32, #tpu.memory_space<smem>>
    %c64 = arith.constant 64 : index
    %185 = memref.load %arg1[%c64] : memref<98xf32, #tpu.memory_space<smem>>
    %c18_i32 = arith.constant 18 : i32
    %186 = tpu.dynamic_rotate %9 by %c18_i32 dim 1 : vector<1x384xf32>, i32 -> vector<1x384xf32>
    %c18_i32_36 = arith.constant 18 : i32
    %187 = tpu.dynamic_rotate %10 by %c18_i32_36 dim 1 : vector<1x384xf32>, i32 -> vector<1x384xf32>
    %188 = vector.broadcast %184 : f32 to vector<1x384xf32>
    %189 = arith.mulf %188, %186 : vector<1x384xf32>
    %190 = vector.broadcast %185 : f32 to vector<1x384xf32>
    %191 = arith.mulf %190, %187 : vector<1x384xf32>
    %192 = arith.addf %189, %191 : vector<1x384xf32>
    %193 = arith.mulf %192, %12 : vector<1x384xf32>
    %194 = arith.addf %183, %193 : vector<1x384xf32>
    %c16 = arith.constant 16 : index
    %195 = memref.load %arg1[%c16] : memref<98xf32, #tpu.memory_space<smem>>
    %c65 = arith.constant 65 : index
    %196 = memref.load %arg1[%c65] : memref<98xf32, #tpu.memory_space<smem>>
    %c17_i32 = arith.constant 17 : i32
    %197 = tpu.dynamic_rotate %9 by %c17_i32 dim 1 : vector<1x384xf32>, i32 -> vector<1x384xf32>
    %c17_i32_37 = arith.constant 17 : i32
    %198 = tpu.dynamic_rotate %10 by %c17_i32_37 dim 1 : vector<1x384xf32>, i32 -> vector<1x384xf32>
    %199 = vector.broadcast %195 : f32 to vector<1x384xf32>
    %200 = arith.mulf %199, %197 : vector<1x384xf32>
    %201 = vector.broadcast %196 : f32 to vector<1x384xf32>
    %202 = arith.mulf %201, %198 : vector<1x384xf32>
    %203 = arith.addf %200, %202 : vector<1x384xf32>
    %204 = arith.mulf %203, %13 : vector<1x384xf32>
    %205 = arith.addf %194, %204 : vector<1x384xf32>
    %c17 = arith.constant 17 : index
    %206 = memref.load %arg1[%c17] : memref<98xf32, #tpu.memory_space<smem>>
    %c66 = arith.constant 66 : index
    %207 = memref.load %arg1[%c66] : memref<98xf32, #tpu.memory_space<smem>>
    %c16_i32 = arith.constant 16 : i32
    %208 = tpu.dynamic_rotate %9 by %c16_i32 dim 1 : vector<1x384xf32>, i32 -> vector<1x384xf32>
    %c16_i32_38 = arith.constant 16 : i32
    %209 = tpu.dynamic_rotate %10 by %c16_i32_38 dim 1 : vector<1x384xf32>, i32 -> vector<1x384xf32>
    %210 = vector.broadcast %206 : f32 to vector<1x384xf32>
    %211 = arith.mulf %210, %208 : vector<1x384xf32>
    %212 = vector.broadcast %207 : f32 to vector<1x384xf32>
    %213 = arith.mulf %212, %209 : vector<1x384xf32>
    %214 = arith.addf %211, %213 : vector<1x384xf32>
    %215 = arith.mulf %214, %14 : vector<1x384xf32>
    %216 = arith.addf %205, %215 : vector<1x384xf32>
    %c18 = arith.constant 18 : index
    %217 = memref.load %arg1[%c18] : memref<98xf32, #tpu.memory_space<smem>>
    %c67 = arith.constant 67 : index
    %218 = memref.load %arg1[%c67] : memref<98xf32, #tpu.memory_space<smem>>
    %c15_i32 = arith.constant 15 : i32
    %219 = tpu.dynamic_rotate %9 by %c15_i32 dim 1 : vector<1x384xf32>, i32 -> vector<1x384xf32>
    %c15_i32_39 = arith.constant 15 : i32
    %220 = tpu.dynamic_rotate %10 by %c15_i32_39 dim 1 : vector<1x384xf32>, i32 -> vector<1x384xf32>
    %221 = vector.broadcast %217 : f32 to vector<1x384xf32>
    %222 = arith.mulf %221, %219 : vector<1x384xf32>
    %223 = vector.broadcast %218 : f32 to vector<1x384xf32>
    %224 = arith.mulf %223, %220 : vector<1x384xf32>
    %225 = arith.addf %222, %224 : vector<1x384xf32>
    %226 = arith.mulf %225, %15 : vector<1x384xf32>
    %227 = arith.addf %216, %226 : vector<1x384xf32>
    %c19 = arith.constant 19 : index
    %228 = memref.load %arg1[%c19] : memref<98xf32, #tpu.memory_space<smem>>
    %c68 = arith.constant 68 : index
    %229 = memref.load %arg1[%c68] : memref<98xf32, #tpu.memory_space<smem>>
    %c14_i32 = arith.constant 14 : i32
    %230 = tpu.dynamic_rotate %9 by %c14_i32 dim 1 : vector<1x384xf32>, i32 -> vector<1x384xf32>
    %c14_i32_40 = arith.constant 14 : i32
    %231 = tpu.dynamic_rotate %10 by %c14_i32_40 dim 1 : vector<1x384xf32>, i32 -> vector<1x384xf32>
    %232 = vector.broadcast %228 : f32 to vector<1x384xf32>
    %233 = arith.mulf %232, %230 : vector<1x384xf32>
    %234 = vector.broadcast %229 : f32 to vector<1x384xf32>
    %235 = arith.mulf %234, %231 : vector<1x384xf32>
    %236 = arith.addf %233, %235 : vector<1x384xf32>
    %237 = arith.mulf %236, %16 : vector<1x384xf32>
    %238 = arith.addf %227, %237 : vector<1x384xf32>
    %c20 = arith.constant 20 : index
    %239 = memref.load %arg1[%c20] : memref<98xf32, #tpu.memory_space<smem>>
    %c69 = arith.constant 69 : index
    %240 = memref.load %arg1[%c69] : memref<98xf32, #tpu.memory_space<smem>>
    %c13_i32 = arith.constant 13 : i32
    %241 = tpu.dynamic_rotate %9 by %c13_i32 dim 1 : vector<1x384xf32>, i32 -> vector<1x384xf32>
    %c13_i32_41 = arith.constant 13 : i32
    %242 = tpu.dynamic_rotate %10 by %c13_i32_41 dim 1 : vector<1x384xf32>, i32 -> vector<1x384xf32>
    %243 = vector.broadcast %239 : f32 to vector<1x384xf32>
    %244 = arith.mulf %243, %241 : vector<1x384xf32>
    %245 = vector.broadcast %240 : f32 to vector<1x384xf32>
    %246 = arith.mulf %245, %242 : vector<1x384xf32>
    %247 = arith.addf %244, %246 : vector<1x384xf32>
    %248 = arith.mulf %247, %17 : vector<1x384xf32>
    %249 = arith.addf %238, %248 : vector<1x384xf32>
    %c21 = arith.constant 21 : index
    %250 = memref.load %arg1[%c21] : memref<98xf32, #tpu.memory_space<smem>>
    %c70 = arith.constant 70 : index
    %251 = memref.load %arg1[%c70] : memref<98xf32, #tpu.memory_space<smem>>
    %c3_i32 = arith.constant 3 : i32
    %252 = tpu.dynamic_rotate %9 by %c3_i32 dim 1 : vector<1x384xf32>, i32 -> vector<1x384xf32>
    %c3_i32_42 = arith.constant 3 : i32
    %253 = tpu.dynamic_rotate %10 by %c3_i32_42 dim 1 : vector<1x384xf32>, i32 -> vector<1x384xf32>
    %254 = vector.broadcast %250 : f32 to vector<1x384xf32>
    %255 = arith.mulf %254, %252 : vector<1x384xf32>
    %256 = vector.broadcast %251 : f32 to vector<1x384xf32>
    %257 = arith.mulf %256, %253 : vector<1x384xf32>
    %258 = arith.addf %255, %257 : vector<1x384xf32>
    %259 = arith.mulf %258, %11 : vector<1x384xf32>
    %260 = arith.addf %249, %259 : vector<1x384xf32>
    %c22 = arith.constant 22 : index
    %261 = memref.load %arg1[%c22] : memref<98xf32, #tpu.memory_space<smem>>
    %c71 = arith.constant 71 : index
    %262 = memref.load %arg1[%c71] : memref<98xf32, #tpu.memory_space<smem>>
    %c2_i32 = arith.constant 2 : i32
    %263 = tpu.dynamic_rotate %9 by %c2_i32 dim 1 : vector<1x384xf32>, i32 -> vector<1x384xf32>
    %c2_i32_43 = arith.constant 2 : i32
    %264 = tpu.dynamic_rotate %10 by %c2_i32_43 dim 1 : vector<1x384xf32>, i32 -> vector<1x384xf32>
    %265 = vector.broadcast %261 : f32 to vector<1x384xf32>
    %266 = arith.mulf %265, %263 : vector<1x384xf32>
    %267 = vector.broadcast %262 : f32 to vector<1x384xf32>
    %268 = arith.mulf %267, %264 : vector<1x384xf32>
    %269 = arith.addf %266, %268 : vector<1x384xf32>
    %270 = arith.mulf %269, %12 : vector<1x384xf32>
    %271 = arith.addf %260, %270 : vector<1x384xf32>
    %c23 = arith.constant 23 : index
    %272 = memref.load %arg1[%c23] : memref<98xf32, #tpu.memory_space<smem>>
    %c72 = arith.constant 72 : index
    %273 = memref.load %arg1[%c72] : memref<98xf32, #tpu.memory_space<smem>>
    %c1_i32 = arith.constant 1 : i32
    %274 = tpu.dynamic_rotate %9 by %c1_i32 dim 1 : vector<1x384xf32>, i32 -> vector<1x384xf32>
    %c1_i32_44 = arith.constant 1 : i32
    %275 = tpu.dynamic_rotate %10 by %c1_i32_44 dim 1 : vector<1x384xf32>, i32 -> vector<1x384xf32>
    %276 = vector.broadcast %272 : f32 to vector<1x384xf32>
    %277 = arith.mulf %276, %274 : vector<1x384xf32>
    %278 = vector.broadcast %273 : f32 to vector<1x384xf32>
    %279 = arith.mulf %278, %275 : vector<1x384xf32>
    %280 = arith.addf %277, %279 : vector<1x384xf32>
    %281 = arith.mulf %280, %13 : vector<1x384xf32>
    %282 = arith.addf %271, %281 : vector<1x384xf32>
    %c24 = arith.constant 24 : index
    %283 = memref.load %arg1[%c24] : memref<98xf32, #tpu.memory_space<smem>>
    %c73 = arith.constant 73 : index
    %284 = memref.load %arg1[%c73] : memref<98xf32, #tpu.memory_space<smem>>
    %285 = vector.broadcast %283 : f32 to vector<1x384xf32>
    %286 = arith.mulf %285, %9 : vector<1x384xf32>
    %287 = vector.broadcast %284 : f32 to vector<1x384xf32>
    %288 = arith.mulf %287, %10 : vector<1x384xf32>
    %289 = arith.addf %286, %288 : vector<1x384xf32>
    %290 = arith.mulf %289, %14 : vector<1x384xf32>
    %291 = arith.addf %282, %290 : vector<1x384xf32>
    %c25 = arith.constant 25 : index
    %292 = memref.load %arg1[%c25] : memref<98xf32, #tpu.memory_space<smem>>
    %c74 = arith.constant 74 : index
    %293 = memref.load %arg1[%c74] : memref<98xf32, #tpu.memory_space<smem>>
    %c383_i32 = arith.constant 383 : i32
    %294 = tpu.dynamic_rotate %9 by %c383_i32 dim 1 : vector<1x384xf32>, i32 -> vector<1x384xf32>
    %c383_i32_45 = arith.constant 383 : i32
    %295 = tpu.dynamic_rotate %10 by %c383_i32_45 dim 1 : vector<1x384xf32>, i32 -> vector<1x384xf32>
    %296 = vector.broadcast %292 : f32 to vector<1x384xf32>
    %297 = arith.mulf %296, %294 : vector<1x384xf32>
    %298 = vector.broadcast %293 : f32 to vector<1x384xf32>
    %299 = arith.mulf %298, %295 : vector<1x384xf32>
    %300 = arith.addf %297, %299 : vector<1x384xf32>
    %301 = arith.mulf %300, %15 : vector<1x384xf32>
    %302 = arith.addf %291, %301 : vector<1x384xf32>
    %c26 = arith.constant 26 : index
    %303 = memref.load %arg1[%c26] : memref<98xf32, #tpu.memory_space<smem>>
    %c75 = arith.constant 75 : index
    %304 = memref.load %arg1[%c75] : memref<98xf32, #tpu.memory_space<smem>>
    %c382_i32 = arith.constant 382 : i32
    %305 = tpu.dynamic_rotate %9 by %c382_i32 dim 1 : vector<1x384xf32>, i32 -> vector<1x384xf32>
    %c382_i32_46 = arith.constant 382 : i32
    %306 = tpu.dynamic_rotate %10 by %c382_i32_46 dim 1 : vector<1x384xf32>, i32 -> vector<1x384xf32>
    %307 = vector.broadcast %303 : f32 to vector<1x384xf32>
    %308 = arith.mulf %307, %305 : vector<1x384xf32>
    %309 = vector.broadcast %304 : f32 to vector<1x384xf32>
    %310 = arith.mulf %309, %306 : vector<1x384xf32>
    %311 = arith.addf %308, %310 : vector<1x384xf32>
    %312 = arith.mulf %311, %16 : vector<1x384xf32>
    %313 = arith.addf %302, %312 : vector<1x384xf32>
    %c27 = arith.constant 27 : index
    %314 = memref.load %arg1[%c27] : memref<98xf32, #tpu.memory_space<smem>>
    %c76 = arith.constant 76 : index
    %315 = memref.load %arg1[%c76] : memref<98xf32, #tpu.memory_space<smem>>
    %c381_i32 = arith.constant 381 : i32
    %316 = tpu.dynamic_rotate %9 by %c381_i32 dim 1 : vector<1x384xf32>, i32 -> vector<1x384xf32>
    %c381_i32_47 = arith.constant 381 : i32
    %317 = tpu.dynamic_rotate %10 by %c381_i32_47 dim 1 : vector<1x384xf32>, i32 -> vector<1x384xf32>
    %318 = vector.broadcast %314 : f32 to vector<1x384xf32>
    %319 = arith.mulf %318, %316 : vector<1x384xf32>
    %320 = vector.broadcast %315 : f32 to vector<1x384xf32>
    %321 = arith.mulf %320, %317 : vector<1x384xf32>
    %322 = arith.addf %319, %321 : vector<1x384xf32>
    %323 = arith.mulf %322, %17 : vector<1x384xf32>
    %324 = arith.addf %313, %323 : vector<1x384xf32>
    %c28 = arith.constant 28 : index
    %325 = memref.load %arg1[%c28] : memref<98xf32, #tpu.memory_space<smem>>
    %c77 = arith.constant 77 : index
    %326 = memref.load %arg1[%c77] : memref<98xf32, #tpu.memory_space<smem>>
    %c371_i32 = arith.constant 371 : i32
    %327 = tpu.dynamic_rotate %9 by %c371_i32 dim 1 : vector<1x384xf32>, i32 -> vector<1x384xf32>
    %c371_i32_48 = arith.constant 371 : i32
    %328 = tpu.dynamic_rotate %10 by %c371_i32_48 dim 1 : vector<1x384xf32>, i32 -> vector<1x384xf32>
    %329 = vector.broadcast %325 : f32 to vector<1x384xf32>
    %330 = arith.mulf %329, %327 : vector<1x384xf32>
    %331 = vector.broadcast %326 : f32 to vector<1x384xf32>
    %332 = arith.mulf %331, %328 : vector<1x384xf32>
    %333 = arith.addf %330, %332 : vector<1x384xf32>
    %334 = arith.mulf %333, %11 : vector<1x384xf32>
    %335 = arith.addf %324, %334 : vector<1x384xf32>
    %c29 = arith.constant 29 : index
    %336 = memref.load %arg1[%c29] : memref<98xf32, #tpu.memory_space<smem>>
    %c78 = arith.constant 78 : index
    %337 = memref.load %arg1[%c78] : memref<98xf32, #tpu.memory_space<smem>>
    %c370_i32 = arith.constant 370 : i32
    %338 = tpu.dynamic_rotate %9 by %c370_i32 dim 1 : vector<1x384xf32>, i32 -> vector<1x384xf32>
    %c370_i32_49 = arith.constant 370 : i32
    %339 = tpu.dynamic_rotate %10 by %c370_i32_49 dim 1 : vector<1x384xf32>, i32 -> vector<1x384xf32>
    %340 = vector.broadcast %336 : f32 to vector<1x384xf32>
    %341 = arith.mulf %340, %338 : vector<1x384xf32>
    %342 = vector.broadcast %337 : f32 to vector<1x384xf32>
    %343 = arith.mulf %342, %339 : vector<1x384xf32>
    %344 = arith.addf %341, %343 : vector<1x384xf32>
    %345 = arith.mulf %344, %12 : vector<1x384xf32>
    %346 = arith.addf %335, %345 : vector<1x384xf32>
    %c30 = arith.constant 30 : index
    %347 = memref.load %arg1[%c30] : memref<98xf32, #tpu.memory_space<smem>>
    %c79 = arith.constant 79 : index
    %348 = memref.load %arg1[%c79] : memref<98xf32, #tpu.memory_space<smem>>
    %c369_i32 = arith.constant 369 : i32
    %349 = tpu.dynamic_rotate %9 by %c369_i32 dim 1 : vector<1x384xf32>, i32 -> vector<1x384xf32>
    %c369_i32_50 = arith.constant 369 : i32
    %350 = tpu.dynamic_rotate %10 by %c369_i32_50 dim 1 : vector<1x384xf32>, i32 -> vector<1x384xf32>
    %351 = vector.broadcast %347 : f32 to vector<1x384xf32>
    %352 = arith.mulf %351, %349 : vector<1x384xf32>
    %353 = vector.broadcast %348 : f32 to vector<1x384xf32>
    %354 = arith.mulf %353, %350 : vector<1x384xf32>
    %355 = arith.addf %352, %354 : vector<1x384xf32>
    %356 = arith.mulf %355, %13 : vector<1x384xf32>
    %357 = arith.addf %346, %356 : vector<1x384xf32>
    %c31 = arith.constant 31 : index
    %358 = memref.load %arg1[%c31] : memref<98xf32, #tpu.memory_space<smem>>
    %c80 = arith.constant 80 : index
    %359 = memref.load %arg1[%c80] : memref<98xf32, #tpu.memory_space<smem>>
    %c368_i32 = arith.constant 368 : i32
    %360 = tpu.dynamic_rotate %9 by %c368_i32 dim 1 : vector<1x384xf32>, i32 -> vector<1x384xf32>
    %c368_i32_51 = arith.constant 368 : i32
    %361 = tpu.dynamic_rotate %10 by %c368_i32_51 dim 1 : vector<1x384xf32>, i32 -> vector<1x384xf32>
    %362 = vector.broadcast %358 : f32 to vector<1x384xf32>
    %363 = arith.mulf %362, %360 : vector<1x384xf32>
    %364 = vector.broadcast %359 : f32 to vector<1x384xf32>
    %365 = arith.mulf %364, %361 : vector<1x384xf32>
    %366 = arith.addf %363, %365 : vector<1x384xf32>
    %367 = arith.mulf %366, %14 : vector<1x384xf32>
    %368 = arith.addf %357, %367 : vector<1x384xf32>
    %c32 = arith.constant 32 : index
    %369 = memref.load %arg1[%c32] : memref<98xf32, #tpu.memory_space<smem>>
    %c81 = arith.constant 81 : index
    %370 = memref.load %arg1[%c81] : memref<98xf32, #tpu.memory_space<smem>>
    %c367_i32 = arith.constant 367 : i32
    %371 = tpu.dynamic_rotate %9 by %c367_i32 dim 1 : vector<1x384xf32>, i32 -> vector<1x384xf32>
    %c367_i32_52 = arith.constant 367 : i32
    %372 = tpu.dynamic_rotate %10 by %c367_i32_52 dim 1 : vector<1x384xf32>, i32 -> vector<1x384xf32>
    %373 = vector.broadcast %369 : f32 to vector<1x384xf32>
    %374 = arith.mulf %373, %371 : vector<1x384xf32>
    %375 = vector.broadcast %370 : f32 to vector<1x384xf32>
    %376 = arith.mulf %375, %372 : vector<1x384xf32>
    %377 = arith.addf %374, %376 : vector<1x384xf32>
    %378 = arith.mulf %377, %15 : vector<1x384xf32>
    %379 = arith.addf %368, %378 : vector<1x384xf32>
    %c33 = arith.constant 33 : index
    %380 = memref.load %arg1[%c33] : memref<98xf32, #tpu.memory_space<smem>>
    %c82 = arith.constant 82 : index
    %381 = memref.load %arg1[%c82] : memref<98xf32, #tpu.memory_space<smem>>
    %c366_i32 = arith.constant 366 : i32
    %382 = tpu.dynamic_rotate %9 by %c366_i32 dim 1 : vector<1x384xf32>, i32 -> vector<1x384xf32>
    %c366_i32_53 = arith.constant 366 : i32
    %383 = tpu.dynamic_rotate %10 by %c366_i32_53 dim 1 : vector<1x384xf32>, i32 -> vector<1x384xf32>
    %384 = vector.broadcast %380 : f32 to vector<1x384xf32>
    %385 = arith.mulf %384, %382 : vector<1x384xf32>
    %386 = vector.broadcast %381 : f32 to vector<1x384xf32>
    %387 = arith.mulf %386, %383 : vector<1x384xf32>
    %388 = arith.addf %385, %387 : vector<1x384xf32>
    %389 = arith.mulf %388, %16 : vector<1x384xf32>
    %390 = arith.addf %379, %389 : vector<1x384xf32>
    %c34 = arith.constant 34 : index
    %391 = memref.load %arg1[%c34] : memref<98xf32, #tpu.memory_space<smem>>
    %c83 = arith.constant 83 : index
    %392 = memref.load %arg1[%c83] : memref<98xf32, #tpu.memory_space<smem>>
    %c365_i32 = arith.constant 365 : i32
    %393 = tpu.dynamic_rotate %9 by %c365_i32 dim 1 : vector<1x384xf32>, i32 -> vector<1x384xf32>
    %c365_i32_54 = arith.constant 365 : i32
    %394 = tpu.dynamic_rotate %10 by %c365_i32_54 dim 1 : vector<1x384xf32>, i32 -> vector<1x384xf32>
    %395 = vector.broadcast %391 : f32 to vector<1x384xf32>
    %396 = arith.mulf %395, %393 : vector<1x384xf32>
    %397 = vector.broadcast %392 : f32 to vector<1x384xf32>
    %398 = arith.mulf %397, %394 : vector<1x384xf32>
    %399 = arith.addf %396, %398 : vector<1x384xf32>
    %400 = arith.mulf %399, %17 : vector<1x384xf32>
    %401 = arith.addf %390, %400 : vector<1x384xf32>
    %c35 = arith.constant 35 : index
    %402 = memref.load %arg1[%c35] : memref<98xf32, #tpu.memory_space<smem>>
    %c84 = arith.constant 84 : index
    %403 = memref.load %arg1[%c84] : memref<98xf32, #tpu.memory_space<smem>>
    %c355_i32 = arith.constant 355 : i32
    %404 = tpu.dynamic_rotate %9 by %c355_i32 dim 1 : vector<1x384xf32>, i32 -> vector<1x384xf32>
    %c355_i32_55 = arith.constant 355 : i32
    %405 = tpu.dynamic_rotate %10 by %c355_i32_55 dim 1 : vector<1x384xf32>, i32 -> vector<1x384xf32>
    %406 = vector.broadcast %402 : f32 to vector<1x384xf32>
    %407 = arith.mulf %406, %404 : vector<1x384xf32>
    %408 = vector.broadcast %403 : f32 to vector<1x384xf32>
    %409 = arith.mulf %408, %405 : vector<1x384xf32>
    %410 = arith.addf %407, %409 : vector<1x384xf32>
    %411 = arith.mulf %410, %11 : vector<1x384xf32>
    %412 = arith.addf %401, %411 : vector<1x384xf32>
    %c36 = arith.constant 36 : index
    %413 = memref.load %arg1[%c36] : memref<98xf32, #tpu.memory_space<smem>>
    %c85 = arith.constant 85 : index
    %414 = memref.load %arg1[%c85] : memref<98xf32, #tpu.memory_space<smem>>
    %c354_i32 = arith.constant 354 : i32
    %415 = tpu.dynamic_rotate %9 by %c354_i32 dim 1 : vector<1x384xf32>, i32 -> vector<1x384xf32>
    %c354_i32_56 = arith.constant 354 : i32
    %416 = tpu.dynamic_rotate %10 by %c354_i32_56 dim 1 : vector<1x384xf32>, i32 -> vector<1x384xf32>
    %417 = vector.broadcast %413 : f32 to vector<1x384xf32>
    %418 = arith.mulf %417, %415 : vector<1x384xf32>
    %419 = vector.broadcast %414 : f32 to vector<1x384xf32>
    %420 = arith.mulf %419, %416 : vector<1x384xf32>
    %421 = arith.addf %418, %420 : vector<1x384xf32>
    %422 = arith.mulf %421, %12 : vector<1x384xf32>
    %423 = arith.addf %412, %422 : vector<1x384xf32>
    %c37 = arith.constant 37 : index
    %424 = memref.load %arg1[%c37] : memref<98xf32, #tpu.memory_space<smem>>
    %c86 = arith.constant 86 : index
    %425 = memref.load %arg1[%c86] : memref<98xf32, #tpu.memory_space<smem>>
    %c353_i32 = arith.constant 353 : i32
    %426 = tpu.dynamic_rotate %9 by %c353_i32 dim 1 : vector<1x384xf32>, i32 -> vector<1x384xf32>
    %c353_i32_57 = arith.constant 353 : i32
    %427 = tpu.dynamic_rotate %10 by %c353_i32_57 dim 1 : vector<1x384xf32>, i32 -> vector<1x384xf32>
    %428 = vector.broadcast %424 : f32 to vector<1x384xf32>
    %429 = arith.mulf %428, %426 : vector<1x384xf32>
    %430 = vector.broadcast %425 : f32 to vector<1x384xf32>
    %431 = arith.mulf %430, %427 : vector<1x384xf32>
    %432 = arith.addf %429, %431 : vector<1x384xf32>
    %433 = arith.mulf %432, %13 : vector<1x384xf32>
    %434 = arith.addf %423, %433 : vector<1x384xf32>
    %c38 = arith.constant 38 : index
    %435 = memref.load %arg1[%c38] : memref<98xf32, #tpu.memory_space<smem>>
    %c87 = arith.constant 87 : index
    %436 = memref.load %arg1[%c87] : memref<98xf32, #tpu.memory_space<smem>>
    %c352_i32 = arith.constant 352 : i32
    %437 = tpu.dynamic_rotate %9 by %c352_i32 dim 1 : vector<1x384xf32>, i32 -> vector<1x384xf32>
    %c352_i32_58 = arith.constant 352 : i32
    %438 = tpu.dynamic_rotate %10 by %c352_i32_58 dim 1 : vector<1x384xf32>, i32 -> vector<1x384xf32>
    %439 = vector.broadcast %435 : f32 to vector<1x384xf32>
    %440 = arith.mulf %439, %437 : vector<1x384xf32>
    %441 = vector.broadcast %436 : f32 to vector<1x384xf32>
    %442 = arith.mulf %441, %438 : vector<1x384xf32>
    %443 = arith.addf %440, %442 : vector<1x384xf32>
    %444 = arith.mulf %443, %14 : vector<1x384xf32>
    %445 = arith.addf %434, %444 : vector<1x384xf32>
    %c39 = arith.constant 39 : index
    %446 = memref.load %arg1[%c39] : memref<98xf32, #tpu.memory_space<smem>>
    %c88 = arith.constant 88 : index
    %447 = memref.load %arg1[%c88] : memref<98xf32, #tpu.memory_space<smem>>
    %c351_i32 = arith.constant 351 : i32
    %448 = tpu.dynamic_rotate %9 by %c351_i32 dim 1 : vector<1x384xf32>, i32 -> vector<1x384xf32>
    %c351_i32_59 = arith.constant 351 : i32
    %449 = tpu.dynamic_rotate %10 by %c351_i32_59 dim 1 : vector<1x384xf32>, i32 -> vector<1x384xf32>
    %450 = vector.broadcast %446 : f32 to vector<1x384xf32>
    %451 = arith.mulf %450, %448 : vector<1x384xf32>
    %452 = vector.broadcast %447 : f32 to vector<1x384xf32>
    %453 = arith.mulf %452, %449 : vector<1x384xf32>
    %454 = arith.addf %451, %453 : vector<1x384xf32>
    %455 = arith.mulf %454, %15 : vector<1x384xf32>
    %456 = arith.addf %445, %455 : vector<1x384xf32>
    %c40 = arith.constant 40 : index
    %457 = memref.load %arg1[%c40] : memref<98xf32, #tpu.memory_space<smem>>
    %c89 = arith.constant 89 : index
    %458 = memref.load %arg1[%c89] : memref<98xf32, #tpu.memory_space<smem>>
    %c350_i32 = arith.constant 350 : i32
    %459 = tpu.dynamic_rotate %9 by %c350_i32 dim 1 : vector<1x384xf32>, i32 -> vector<1x384xf32>
    %c350_i32_60 = arith.constant 350 : i32
    %460 = tpu.dynamic_rotate %10 by %c350_i32_60 dim 1 : vector<1x384xf32>, i32 -> vector<1x384xf32>
    %461 = vector.broadcast %457 : f32 to vector<1x384xf32>
    %462 = arith.mulf %461, %459 : vector<1x384xf32>
    %463 = vector.broadcast %458 : f32 to vector<1x384xf32>
    %464 = arith.mulf %463, %460 : vector<1x384xf32>
    %465 = arith.addf %462, %464 : vector<1x384xf32>
    %466 = arith.mulf %465, %16 : vector<1x384xf32>
    %467 = arith.addf %456, %466 : vector<1x384xf32>
    %c41 = arith.constant 41 : index
    %468 = memref.load %arg1[%c41] : memref<98xf32, #tpu.memory_space<smem>>
    %c90 = arith.constant 90 : index
    %469 = memref.load %arg1[%c90] : memref<98xf32, #tpu.memory_space<smem>>
    %c349_i32 = arith.constant 349 : i32
    %470 = tpu.dynamic_rotate %9 by %c349_i32 dim 1 : vector<1x384xf32>, i32 -> vector<1x384xf32>
    %c349_i32_61 = arith.constant 349 : i32
    %471 = tpu.dynamic_rotate %10 by %c349_i32_61 dim 1 : vector<1x384xf32>, i32 -> vector<1x384xf32>
    %472 = vector.broadcast %468 : f32 to vector<1x384xf32>
    %473 = arith.mulf %472, %470 : vector<1x384xf32>
    %474 = vector.broadcast %469 : f32 to vector<1x384xf32>
    %475 = arith.mulf %474, %471 : vector<1x384xf32>
    %476 = arith.addf %473, %475 : vector<1x384xf32>
    %477 = arith.mulf %476, %17 : vector<1x384xf32>
    %478 = arith.addf %467, %477 : vector<1x384xf32>
    %c42 = arith.constant 42 : index
    %479 = memref.load %arg1[%c42] : memref<98xf32, #tpu.memory_space<smem>>
    %c91 = arith.constant 91 : index
    %480 = memref.load %arg1[%c91] : memref<98xf32, #tpu.memory_space<smem>>
    %c339_i32 = arith.constant 339 : i32
    %481 = tpu.dynamic_rotate %9 by %c339_i32 dim 1 : vector<1x384xf32>, i32 -> vector<1x384xf32>
    %c339_i32_62 = arith.constant 339 : i32
    %482 = tpu.dynamic_rotate %10 by %c339_i32_62 dim 1 : vector<1x384xf32>, i32 -> vector<1x384xf32>
    %483 = vector.broadcast %479 : f32 to vector<1x384xf32>
    %484 = arith.mulf %483, %481 : vector<1x384xf32>
    %485 = vector.broadcast %480 : f32 to vector<1x384xf32>
    %486 = arith.mulf %485, %482 : vector<1x384xf32>
    %487 = arith.addf %484, %486 : vector<1x384xf32>
    %488 = arith.mulf %487, %11 : vector<1x384xf32>
    %489 = arith.addf %478, %488 : vector<1x384xf32>
    %c43 = arith.constant 43 : index
    %490 = memref.load %arg1[%c43] : memref<98xf32, #tpu.memory_space<smem>>
    %c92 = arith.constant 92 : index
    %491 = memref.load %arg1[%c92] : memref<98xf32, #tpu.memory_space<smem>>
    %c338_i32 = arith.constant 338 : i32
    %492 = tpu.dynamic_rotate %9 by %c338_i32 dim 1 : vector<1x384xf32>, i32 -> vector<1x384xf32>
    %c338_i32_63 = arith.constant 338 : i32
    %493 = tpu.dynamic_rotate %10 by %c338_i32_63 dim 1 : vector<1x384xf32>, i32 -> vector<1x384xf32>
    %494 = vector.broadcast %490 : f32 to vector<1x384xf32>
    %495 = arith.mulf %494, %492 : vector<1x384xf32>
    %496 = vector.broadcast %491 : f32 to vector<1x384xf32>
    %497 = arith.mulf %496, %493 : vector<1x384xf32>
    %498 = arith.addf %495, %497 : vector<1x384xf32>
    %499 = arith.mulf %498, %12 : vector<1x384xf32>
    %500 = arith.addf %489, %499 : vector<1x384xf32>
    %c44 = arith.constant 44 : index
    %501 = memref.load %arg1[%c44] : memref<98xf32, #tpu.memory_space<smem>>
    %c93 = arith.constant 93 : index
    %502 = memref.load %arg1[%c93] : memref<98xf32, #tpu.memory_space<smem>>
    %c337_i32 = arith.constant 337 : i32
    %503 = tpu.dynamic_rotate %9 by %c337_i32 dim 1 : vector<1x384xf32>, i32 -> vector<1x384xf32>
    %c337_i32_64 = arith.constant 337 : i32
    %504 = tpu.dynamic_rotate %10 by %c337_i32_64 dim 1 : vector<1x384xf32>, i32 -> vector<1x384xf32>
    %505 = vector.broadcast %501 : f32 to vector<1x384xf32>
    %506 = arith.mulf %505, %503 : vector<1x384xf32>
    %507 = vector.broadcast %502 : f32 to vector<1x384xf32>
    %508 = arith.mulf %507, %504 : vector<1x384xf32>
    %509 = arith.addf %506, %508 : vector<1x384xf32>
    %510 = arith.mulf %509, %13 : vector<1x384xf32>
    %511 = arith.addf %500, %510 : vector<1x384xf32>
    %c45 = arith.constant 45 : index
    %512 = memref.load %arg1[%c45] : memref<98xf32, #tpu.memory_space<smem>>
    %c94 = arith.constant 94 : index
    %513 = memref.load %arg1[%c94] : memref<98xf32, #tpu.memory_space<smem>>
    %c336_i32 = arith.constant 336 : i32
    %514 = tpu.dynamic_rotate %9 by %c336_i32 dim 1 : vector<1x384xf32>, i32 -> vector<1x384xf32>
    %c336_i32_65 = arith.constant 336 : i32
    %515 = tpu.dynamic_rotate %10 by %c336_i32_65 dim 1 : vector<1x384xf32>, i32 -> vector<1x384xf32>
    %516 = vector.broadcast %512 : f32 to vector<1x384xf32>
    %517 = arith.mulf %516, %514 : vector<1x384xf32>
    %518 = vector.broadcast %513 : f32 to vector<1x384xf32>
    %519 = arith.mulf %518, %515 : vector<1x384xf32>
    %520 = arith.addf %517, %519 : vector<1x384xf32>
    %521 = arith.mulf %520, %14 : vector<1x384xf32>
    %522 = arith.addf %511, %521 : vector<1x384xf32>
    %c46 = arith.constant 46 : index
    %523 = memref.load %arg1[%c46] : memref<98xf32, #tpu.memory_space<smem>>
    %c95 = arith.constant 95 : index
    %524 = memref.load %arg1[%c95] : memref<98xf32, #tpu.memory_space<smem>>
    %c335_i32 = arith.constant 335 : i32
    %525 = tpu.dynamic_rotate %9 by %c335_i32 dim 1 : vector<1x384xf32>, i32 -> vector<1x384xf32>
    %c335_i32_66 = arith.constant 335 : i32
    %526 = tpu.dynamic_rotate %10 by %c335_i32_66 dim 1 : vector<1x384xf32>, i32 -> vector<1x384xf32>
    %527 = vector.broadcast %523 : f32 to vector<1x384xf32>
    %528 = arith.mulf %527, %525 : vector<1x384xf32>
    %529 = vector.broadcast %524 : f32 to vector<1x384xf32>
    %530 = arith.mulf %529, %526 : vector<1x384xf32>
    %531 = arith.addf %528, %530 : vector<1x384xf32>
    %532 = arith.mulf %531, %15 : vector<1x384xf32>
    %533 = arith.addf %522, %532 : vector<1x384xf32>
    %c47 = arith.constant 47 : index
    %534 = memref.load %arg1[%c47] : memref<98xf32, #tpu.memory_space<smem>>
    %c96 = arith.constant 96 : index
    %535 = memref.load %arg1[%c96] : memref<98xf32, #tpu.memory_space<smem>>
    %c334_i32 = arith.constant 334 : i32
    %536 = tpu.dynamic_rotate %9 by %c334_i32 dim 1 : vector<1x384xf32>, i32 -> vector<1x384xf32>
    %c334_i32_67 = arith.constant 334 : i32
    %537 = tpu.dynamic_rotate %10 by %c334_i32_67 dim 1 : vector<1x384xf32>, i32 -> vector<1x384xf32>
    %538 = vector.broadcast %534 : f32 to vector<1x384xf32>
    %539 = arith.mulf %538, %536 : vector<1x384xf32>
    %540 = vector.broadcast %535 : f32 to vector<1x384xf32>
    %541 = arith.mulf %540, %537 : vector<1x384xf32>
    %542 = arith.addf %539, %541 : vector<1x384xf32>
    %543 = arith.mulf %542, %16 : vector<1x384xf32>
    %544 = arith.addf %533, %543 : vector<1x384xf32>
    %c48 = arith.constant 48 : index
    %545 = memref.load %arg1[%c48] : memref<98xf32, #tpu.memory_space<smem>>
    %c97 = arith.constant 97 : index
    %546 = memref.load %arg1[%c97] : memref<98xf32, #tpu.memory_space<smem>>
    %c333_i32 = arith.constant 333 : i32
    %547 = tpu.dynamic_rotate %9 by %c333_i32 dim 1 : vector<1x384xf32>, i32 -> vector<1x384xf32>
    %c333_i32_68 = arith.constant 333 : i32
    %548 = tpu.dynamic_rotate %10 by %c333_i32_68 dim 1 : vector<1x384xf32>, i32 -> vector<1x384xf32>
    %549 = vector.broadcast %545 : f32 to vector<1x384xf32>
    %550 = arith.mulf %549, %547 : vector<1x384xf32>
    %551 = vector.broadcast %546 : f32 to vector<1x384xf32>
    %552 = arith.mulf %551, %548 : vector<1x384xf32>
    %553 = arith.addf %550, %552 : vector<1x384xf32>
    %554 = arith.mulf %553, %17 : vector<1x384xf32>
    %555 = arith.addf %544, %554 : vector<1x384xf32>
    %556 = vector.extract_strided_slice %555 {offsets = [0, 0], sizes = [1, 256], strides = [1, 1]} : vector<1x384xf32> to vector<1x256xf32>
    %557 = arith.negf %556 : vector<1x256xf32>
    %558 = math.exp %557 : vector<1x256xf32>
    %cst_69 = arith.constant 1.000000e+00 : f32
    %559 = vector.broadcast %cst_69 : f32 to vector<1x256xf32>
    %560 = arith.addf %559, %558 : vector<1x256xf32>
    %561 = arith.divf %559, %560 : vector<1x256xf32>
    %c0_70 = arith.constant 0 : index
    %c0_71 = arith.constant 0 : index
    %c0_72 = arith.constant 0 : index
    %562 = vector.load %arg3[%c0_70, %c0_71, %c0_72] : memref<1x4x256xf32, #tpu.memory_space<vmem>>, vector<1x4x256xf32>
    %563 = vector.shape_cast %562 : vector<1x4x256xf32> to vector<4x256xf32>
    %564 = vector.broadcast %561 : vector<1x256xf32> to vector<4x256xf32>
    %565 = arith.mulf %563, %564 : vector<4x256xf32>
    %c0_73 = arith.constant 0 : index
    %c0_74 = arith.constant 0 : index
    %c0_75 = arith.constant 0 : index
    %566 = vector.load %arg4[%c0_73, %c0_74, %c0_75] : memref<1x4x256xf32, #tpu.memory_space<vmem>>, vector<1x4x256xf32>
    %567 = vector.shape_cast %566 : vector<1x4x256xf32> to vector<4x256xf32>
    %568 = vector.shape_cast %565 : vector<4x256xf32> to vector<1x4x256xf32>
    tpu.vector_store %arg4[%c0_73, %c0_74, %c0_75], %568 {strides = array<i32>} : memref<1x4x256xf32, #tpu.memory_space<vmem>>, vector<1x4x256xf32>,
    return
  }
  func.func @transform_0(%arg0: i32) -> i32 {
    %c0_i32 = arith.constant 0 : i32
    %c0_i32_0 = arith.constant 0 : i32
    return %c0_i32 : i32
  }
  func.func @transform_1(%arg0: i32) -> (i32, i32) {
    %c0_i32 = arith.constant 0 : i32
    %c0_i32_0 = arith.constant 0 : i32
    %c0_i32_1 = arith.constant 0 : i32
    return %c0_i32, %c0_i32_0 : i32, i32
  }
  func.func @transform_2(%arg0: i32) -> (i32, i32, i32) {
    %c0_i32 = arith.constant 0 : i32
    %c0_i32_0 = arith.constant 0 : i32
    %c0_i32_1 = arith.constant 0 : i32
    return %arg0, %c0_i32, %c0_i32_0 : i32, i32, i32
  }
  func.func @transform_3(%arg0: i32) -> (i32, i32, i32) {
    %c0_i32 = arith.constant 0 : i32
    %c0_i32_0 = arith.constant 0 : i32
    %c0_i32_1 = arith.constant 0 : i32
    return %arg0, %c0_i32, %c0_i32_0 : i32, i32, i32
  }
}

</mosaic_0001>

<llo_original>
// kernel: tpu_custom_call.1
$region0: #{tpu_custom_call.1}
  #allocation0 [shape = 'u32[]', space=smem, size = 0x4, offset = 0x4, fixed_abs, tag = 'smem constant byte address 0x4 - core index']
  #allocation1 [shape = 'u32[144,128]{1,0:T(1,128)}', space=vmem, size = 0x12000, scoped, tag = 'internal scratch']
  %s0 = inlined_call_operand.hbm [shape: f32[98], index: 0, kind: input, shape index: {}]
  %s1 = inlined_call_operand.hbm [shape: f32[7,384], index: 1, kind: input, shape index: {}]
  %s2 = inlined_call_operand.hbm [shape: f32[2,4,256], index: 2, kind: input, shape index: {}]
  %s3 = inlined_call_operand.hbm [shape: f32[2,4,256], index: 3, kind: output, shape index: {}]
  %s4 = sld [smem:[#allocation0]]
  $region57: #{tpu_custom_call.1} parent=0
    _
  %s6 = ssub.s32 1, %s4
  %s7 = scalar_select 0, %s6, %s4
  $region1: #{tpu_custom_call.1} parent=0
    #allocation2 [shape = 'u8[512]{0}', space=smem, size = 0x200, scoped, tag = 'input window, operand 0, single buffered']
    #allocation3 [shape = 's32[2]{0}', space=sflag, size = 0x8, scoped, tag = 'scoped memory for tpu_custom_call.1']
    #allocation4 [shape = 's32[2]{0}', space=sflag, size = 0x8, scoped, tag = 'scoped memory for tpu_custom_call.1']
    #allocation5 [shape = 's32[2]{0}', space=sflag, size = 0x8, scoped, tag = 'scoped memory for tpu_custom_call.1']
    #allocation6 [shape = 'u8[12288]{0}', space=vmem, size = 0x3000, scoped, tag = 'input window, operand 1, single buffered']
    #allocation7 [shape = 'u8[8192]{0}', space=vmem, size = 0x2000, scoped, tag = 'input window, operand 2']
    #allocation8 [shape = 's32[2]{0}', space=sflag, size = 0x8, scoped, tag = 'scoped memory for tpu_custom_call.1']
    #allocation9 [shape = 'u8[8192]{0}', space=vmem, size = 0x2000, scoped, tag = 'output window, operand 0']
    %8 = vsyncpa [#allocation5], 0
    %9 = vsyncpa [#allocation3], 0
    %10 = vsyncpa [#allocation8], 0
    %s11 = scalar_lea.sflag [#allocation8], 1
    %12 = vsyncpa %s11, 0
    %13 = vsyncpa [#allocation4], 0
    %s14 = scalar_lea.sflag [#allocation4], 1
    %15 = vsyncpa %s14, 0
    loop: start=0, step=1, limit=4
    $region2: #{tpu_custom_call.1} parent=1 // loop_pre_header
      _
    $region3: #{tpu_custom_call.1} parent=1 // loop_header
      %s17 = sphi 0, %s21
      %p18 = scmp.ge.s32.totalorder %s17, 4
      %s25 = sphi 0, %s25
      %s27 = sphi 0, %s25
      %s28 = sphi 0, %s27
      %s42 = sphi 0, %s28
      %s46 = sphi 0, %s46
      %s48 = sphi 0, %s46
      %s49 = sphi 0, %s48
      %s63 = sphi 0, %s49
      %s69 = sphi 0, %s71
      %s72 = sphi 0, %s69
      %s73 = sphi 0, %s72
      %s89 = sphi 0, %s73
      %s95 = sphi 0, %s97
      %s98 = sphi 0, %s95
      %s99 = sphi 0, %s98
      %s115 = sphi 0, %s99
    $region4: #{tpu_custom_call.1} parent=1 // loop_header_branch
      %20 = sbr.rel (%p18) target = $region8
    $region5: #{tpu_custom_call.1} parent=1 // loop_body
      %s22 = ssub.s32 %s17, 1
      %s23 = ssub.s32 %s17, 2
      %s24 = sadd.s32 %s17, 1
      %s26 = sadd.s32 %s25, 1
      %p29 = scmp.eq.s32.totalorder %s17, 1
      %p30 = scmp.ne.s32.totalorder %s25, %s27
      %p31 = scmp.eq.s32.totalorder %s17, 0
      %p32 = por %p30, %p31
      %p33 = scmp.ne.s32.totalorder %s25, %s27
      %p34 = scmp.eq.s32.totalorder %s22, 1
      %p35 = por %p33, %p34
      %p36 = scmp.ne.s32.totalorder %s27, %s28
      %p37 = scmp.eq.s32.totalorder %s22, 0
      %p38 = por %p36, %p37
      %p39 = scmp.ne.s32.totalorder %s27, %s28
      %p40 = scmp.eq.s32.totalorder %s23, 1
      %p41 = por %p39, %p40
      %p43 = scmp.ne.s32.totalorder %s28, %s42
      %p44 = scmp.eq.s32.totalorder %s23, 0
      %p45 = por %p43, %p44
      %s47 = sadd.s32 %s46, 1
      %p50 = scmp.eq.s32.totalorder %s17, 1
      %p51 = scmp.ne.s32.totalorder %s46, %s48
      %p52 = scmp.eq.s32.totalorder %s17, 0
      %p53 = por %p51, %p52
      %p54 = scmp.ne.s32.totalorder %s46, %s48
      %p55 = scmp.eq.s32.totalorder %s22, 1
      %p56 = por %p54, %p55
      %p57 = scmp.ne.s32.totalorder %s48, %s49
      %p58 = scmp.eq.s32.totalorder %s22, 0
      %p59 = por %p57, %p58
      %p60 = scmp.ne.s32.totalorder %s48, %s49
      %p61 = scmp.eq.s32.totalorder %s23, 1
      %p62 = por %p60, %p61
      %p64 = scmp.ne.s32.totalorder %s49, %s63
      %p65 = scmp.eq.s32.totalorder %s23, 0
      %p66 = por %p64, %p65
      %s67 = ssub.s32 %s17, %s24
      %p68 = scmp.eq.s32.totalorder %s67, 0
      %s70 = sadd.s32 %s69, 1
      %s71 = scalar_select %p68, %s69, %s70
      %p74 = pneg %p68
      %p75 = scmp.eq.s32.totalorder %s17, 1
      %p76 = por %p74, %p75
      %p77 = scmp.ne.s32.totalorder %s69, %s72
      %p78 = scmp.eq.s32.totalorder %s17, 0
      %p79 = por %p77, %p78
      %p80 = scmp.ne.s32.totalorder %s69, %s72
      %p81 = scmp.eq.s32.totalorder %s22, 1
      %p82 = por %p80, %p81
      %p83 = scmp.ne.s32.totalorder %s72, %s73
      %p84 = scmp.eq.s32.totalorder %s22, 0
      %p85 = por %p83, %p84
      %p86 = scmp.ne.s32.totalorder %s72, %s73
      %p87 = scmp.eq.s32.totalorder %s23, 1
      %p88 = por %p86, %p87
      %p90 = scmp.ne.s32.totalorder %s73, %s89
      %p91 = scmp.eq.s32.totalorder %s23, 0
      %p92 = por %p90, %p91
      %s93 = ssub.s32 %s17, %s24
      %p94 = scmp.eq.s32.totalorder %s93, 0
      %s96 = sadd.s32 %s95, 1
      %s97 = scalar_select %p94, %s95, %s96
      %p100 = pneg %p94
      %p101 = scmp.eq.s32.totalorder %s17, 1
      %p102 = por %p100, %p101
      %p103 = scmp.ne.s32.totalorder %s95, %s98
      %p104 = scmp.eq.s32.totalorder %s17, 0
      %p105 = por %p103, %p104
      %p106 = scmp.ne.s32.totalorder %s95, %s98
      %p107 = scmp.eq.s32.totalorder %s22, 1
      %p108 = por %p106, %p107
      %p109 = scmp.ne.s32.totalorder %s98, %s99
      %p110 = scmp.eq.s32.totalorder %s22, 0
      %p111 = por %p109, %p110
      %p112 = scmp.ne.s32.totalorder %s98, %s99
      %p113 = scmp.eq.s32.totalorder %s23, 1
      %p114 = por %p112, %p113
      %p116 = scmp.ne.s32.totalorder %s99, %s115
      %p117 = scmp.eq.s32.totalorder %s23, 0
      %p118 = por %p116, %p117
      %p119 = scmp.le.s32.totalorder 1, %s17
      %p120 = scmp.lt.s32.totalorder %s17, 3
      %p121 = pnand %p119, %p120
      %p122 = pneg %p121
      // Predicated region
      $region9: #{tpu_custom_call.1} parent=5 // pred_check
        _
      $region10: #{tpu_custom_call.1} parent=5 // pred_check_branch
        %124 = sbr.rel (%p121) target = $region12
      $region11: #{tpu_custom_call.1} parent=5 // pred_region
        %s125 = ssub.s32 %s17, 1
        // Predicated region
        $region13: #{tpu_custom_call.1} parent=11 // pred_check
          %p126 = pneg %p38
        $region14: #{tpu_custom_call.1} parent=11 // pred_check_branch
          %128 = sbr.rel (%p126) target = $region16
        $region15: #{tpu_custom_call.1} parent=11 // pred_region
          %s130 = ssub.s32 16, 16
          %131 = vsyncadd [#allocation5], %s130
          %134 = dma.hbm_to_smem %s0, 16, [#allocation2], [#allocation5]
        $region16: #{tpu_custom_call.1} parent=11 // pred_fallthru
          _
        // Predicated region
        $region17: #{tpu_custom_call.1} parent=11 // pred_check
          %p135 = pneg %p59
        $region18: #{tpu_custom_call.1} parent=11 // pred_check_branch
          %137 = sbr.rel (%p135) target = $region20
        $region19: #{tpu_custom_call.1} parent=11 // pred_region
          %s139 = ssub.s32 384, 384
          %140 = vsyncadd [#allocation3], %s139
          %s142 = sshll.u32 [#allocation6], 4
          %s143 = int_to_ptr.vmem [resolvable:$true] %s142
          %145 = dma.hbm_to_vmem [thread:$0]  %s1, 384, %s143, [#allocation3]
        $region20: #{tpu_custom_call.1} parent=11 // pred_fallthru
          _
      $region12: #{tpu_custom_call.1} parent=5 // pred_fallthru
        _
      %p146 = scmp.lt.s32.totalorder %s17, 2
      // Predicated region
      $region21: #{tpu_custom_call.1} parent=5 // pred_check
        %p147 = pneg %p146
      $region22: #{tpu_custom_call.1} parent=5 // pred_check_branch
        %149 = sbr.rel (%p147) target = $region24
      $region23: #{tpu_custom_call.1} parent=5 // pred_region
        // Predicated region
        $region25: #{tpu_custom_call.1} parent=23 // pred_check
          %p150 = pneg %p79
        $region26: #{tpu_custom_call.1} parent=23 // pred_check_branch
          %152 = sbr.rel (%p150) target = $region28
        $region27: #{tpu_custom_call.1} parent=23 // pred_region
          %s153 = sand.u32 %s69, 1
          %s154 = scalar_lea.sflag [#allocation8], %s153
          %s155 = sand.u32 %s69, 1
          %s156 = smul.addr %s155, 8
          %s157 = scalar_lea.vmem [#allocation7], %s156
          %s159 = ssub.s32 128, 128
          %160 = vsyncadd %s154, %s159
          %s161 = smul.addr %s17, 2
          %s162 = smul.addr %s161, 64
          %s163 = scalar_lea.hbm %s2, %s162
          %s165 = sshll.u32 %s157, 4
          %s166 = int_to_ptr.vmem [resolvable:$true] %s165
          %168 = dma.hbm_to_vmem [thread:$0]  %s163, 128, %s166, %s154
        $region28: #{tpu_custom_call.1} parent=23 // pred_fallthru
          _
      $region24: #{tpu_custom_call.1} parent=5 // pred_fallthru
        _
      %p169 = scmp.le.s32.totalorder 1, %s17
      %p170 = scmp.lt.s32.totalorder %s17, 3
      %p171 = pnand %p169, %p170
      %p172 = pneg %p171
      // Predicated region
      $region29: #{tpu_custom_call.1} parent=5 // pred_check
        _
      $region30: #{tpu_custom_call.1} parent=5 // pred_check_branch
        %174 = sbr.rel (%p171) target = $region32
      $region31: #{tpu_custom_call.1} parent=5 // pred_region
        %s175 = ssub.s32 %s17, 1
        // Predicated region
        $region33: #{tpu_custom_call.1} parent=31 // pred_check
          %p176 = pneg %p38
        $region34: #{tpu_custom_call.1} parent=31 // pred_check_branch
          %178 = sbr.rel (%p176) target = $region36
        $region35: #{tpu_custom_call.1} parent=31 // pred_region
          %179 = dma.done [#allocation5], 16
        $region36: #{tpu_custom_call.1} parent=31 // pred_fallthru
          _
        // Predicated region
        $region37: #{tpu_custom_call.1} parent=31 // pred_check
          %p180 = pneg %p59
        $region38: #{tpu_custom_call.1} parent=31 // pred_check_branch
          %182 = sbr.rel (%p180) target = $region40
        $region39: #{tpu_custom_call.1} parent=31 // pred_region
          %183 = dma.done [#allocation3], 384
        $region40: #{tpu_custom_call.1} parent=31 // pred_fallthru
          _
        %s184 = sand.u32 %s72, 1
        %s185 = scalar_lea.sflag [#allocation8], %s184
        %s186 = sand.u32 %s72, 1
        %s187 = smul.addr %s186, 8
        %s188 = scalar_lea.vmem [#allocation7], %s187
        // Predicated region
        $region41: #{tpu_custom_call.1} parent=31 // pred_check
          %p189 = pneg %p85
        $region42: #{tpu_custom_call.1} parent=31 // pred_check_branch
          %191 = sbr.rel (%p189) target = $region44
        $region43: #{tpu_custom_call.1} parent=31 // pred_region
          %192 = dma.done %s185, 128
        $region44: #{tpu_custom_call.1} parent=31 // pred_fallthru
          _
        %193 = sfence
        %p194 = pneg %p38
        %p195 = pneg %p35
        %p196 = pneg %p59
        %p197 = pneg %p56
        %s198 = sand.u32 %s72, 1
        %s199 = scalar_lea.sflag [#allocation8], %s198
        %s200 = sand.u32 %s72, 1
        %s201 = smul.addr %s200, 8
        %s202 = scalar_lea.vmem [#allocation7], %s201
        %p203 = pneg %p85
        %p204 = pneg %p82
        %p205 = pneg %p111
        %p206 = pneg %p108
        %s207 = sand.u32 %s98, 1
        %s208 = scalar_lea.sflag [#allocation4], %s207
        %s209 = sand.u32 %s98, 1
        %s210 = smul.addr %s209, 8
        %s211 = scalar_lea.vmem [#allocation9], %s210
        %v212 = vld [vmem:[%s188] sm:$0xff]
        %v214 = vcombine.high %v212, %v212
        %vm216 = vcmask 1043456
        %v217 = vsel %vm216, %v212, -inf
        %v218 = vrot.slane %v217, 4
        %v219 = vmax.f32 %v217, %v218
        %v220 = vrot.slane %v219, 2
        %v221 = vmax.f32 %v219, %v220
        %v222 = vrot.slane %v221, 1
        %v223 = vmax.f32 %v221, %v222
        %v224 = vsel %vm216, %v214, -inf
        %v225 = vrot.slane %v224, 4
        %v226 = vmax.f32 %v224, %v225
        %v227 = vrot.slane %v226, 2
        %v228 = vmax.f32 %v226, %v227
        %v229 = vrot.slane %v228, 1
        %v230 = vmax.f32 %v228, %v229
        %v231 = vsel %vm216, %v212, 0.0
        %v232 = vrot.slane %v231, 4
        %v233 = vadd.f32 %v231, %v232
        %v234 = vrot.slane %v233, 2
        %v235 = vadd.f32 %v233, %v234
        %v236 = vrot.slane %v235, 1
        %v237 = vadd.f32 %v235, %v236
        %v238 = vsel %vm216, %v214, 0.0
        %v239 = vrot.slane %v238, 4
        %v240 = vadd.f32 %v238, %v239
        %v241 = vrot.slane %v240, 2
        %v242 = vadd.f32 %v240, %v241
        %v243 = vrot.slane %v242, 1
        %v244 = vadd.f32 %v242, %v243
        %v245 = vmul.f32 %v237, 0.25
        %v246 = vmul.f32 %v244, 0.25
        %v247 = vld [vmem:[#allocation6] ss:$8 sm:$0x7]
        %s248 = scalar_lea.vmem [#allocation6], 1
        %v249 = vld [vmem:[%s248] ss:$8 sm:$0x7]
        %s250 = scalar_lea.vmem [#allocation6], 2
        %v251 = vld [vmem:[%s250] ss:$8 sm:$0x7]
        %s252 = scalar_lea.vmem [#allocation6], 3
        %v253 = vld [vmem:[%s252] ss:$8 sm:$0x7]
        %s254 = scalar_lea.vmem [#allocation6], 4
        %v255 = vld [vmem:[%s254] ss:$8 sm:$0x7]
        %s256 = scalar_lea.vmem [#allocation6], 5
        %v257 = vld [vmem:[%s256] ss:$8 sm:$0x7]
        %s258 = scalar_lea.vmem [#allocation6], 6
        %v259 = vld [vmem:[%s258] ss:$8 sm:$0x7]
        %s260 = sld [smem:[#allocation2]]
        %s261 = sld [smem:[#allocation2 + $0x31]]
        %262 = vrot.lane.b32.xlu0 %v223, 51
        %v263 = vpop.permute.xlu0 %262
        %264 = vrot.lane.b32.xlu0 %v230, 51
        %v265 = vpop.permute.xlu0 %264
        %266 = vrot.lane.b32.xlu0 0.0, 51
        %v267 = vpop.permute.xlu0 %266
        %v268 = vlaneseq
        %v269 = vand.u32 %v268, 127
        %vm270 = vcmp.lt.s32.totalorder %v269, 51
        %v271 = vsel %vm270, %v263, %v265
        %v272 = vsel %vm270, %v267, %v263
        %273 = vrot.lane.b32.xlu0 %v245, 51
        %v274 = vpop.permute.xlu0 %273
        %275 = vrot.lane.b32.xlu0 %v246, 51
        %v276 = vpop.permute.xlu0 %275
        %v277 = vsel %vm270, %v274, %v276
        %v278 = vsel %vm270, %v267, %v274
        %v279 = vstv %s260
        %v280 = vmul.f32 %v279, %v272
        %v281 = vmul.f32 %v279, %v271
        %v282 = vstv %s261
        %v283 = vmul.f32 %v282, %v278
        %v284 = vmul.f32 %v282, %v277
        %v285 = vadd.f32 %v280, %v283
        %v286 = vadd.f32 %v281, %v284
        %v288 = vlaneseq
        %v289 = vshrl.u32 %v288, 7
        %v290 = vsub.s32 0, %v289
        %v291 = vrot.slane %v247, %v290
        %v292 = vlaneseq
        %v293 = vshrl.u32 %v292, 7
        %v294 = vsub.s32 1, %v293
        %v295 = vrot.slane %v247, %v294
        %v298 = vmul.f32 %v285, %v291
        %v299 = vmul.f32 %v286, %v295
        %v300 = vadd.f32 %v298, 0.0
        %v301 = vadd.f32 %v299, 0.0
        %s302 = sld [smem:[#allocation2 + $0x1]]
        %s303 = sld [smem:[#allocation2 + $0x32]]
        %304 = vrot.lane.b32.xlu0 %v223, 50
        %v305 = vpop.permute.xlu0 %304
        %306 = vrot.lane.b32.xlu0 %v230, 50
        %v307 = vpop.permute.xlu0 %306
        %308 = vrot.lane.b32.xlu0 0.0, 50
        %v309 = vpop.permute.xlu0 %308
        %vm310 = vcmp.lt.s32.totalorder %v269, 50
        %v311 = vsel %vm310, %v305, %v307
        %v312 = vsel %vm310, %v309, %v305
        %313 = vrot.lane.b32.xlu0 %v245, 50
        %v314 = vpop.permute.xlu0 %313
        %315 = vrot.lane.b32.xlu0 %v246, 50
        %v316 = vpop.permute.xlu0 %315
        %v317 = vsel %vm310, %v314, %v316
        %v318 = vsel %vm310, %v309, %v314
        %v319 = vstv %s302
        %v320 = vmul.f32 %v319, %v312
        %v321 = vmul.f32 %v319, %v311
        %v322 = vstv %s303
        %v323 = vmul.f32 %v322, %v318
        %v324 = vmul.f32 %v322, %v317
        %v325 = vadd.f32 %v320, %v323
        %v326 = vadd.f32 %v321, %v324
        %v328 = vlaneseq
        %v329 = vshrl.u32 %v328, 7
        %v330 = vsub.s32 0, %v329
        %v331 = vrot.slane %v249, %v330
        %v332 = vlaneseq
        %v333 = vshrl.u32 %v332, 7
        %v334 = vsub.s32 1, %v333
        %v335 = vrot.slane %v249, %v334
        %v338 = vmul.f32 %v325, %v331
        %v339 = vmul.f32 %v326, %v335
        %v340 = vadd.f32 %v300, %v338
        %v341 = vadd.f32 %v301, %v339
        %s342 = sld [smem:[#allocation2 + $0x2]]
        %s343 = sld [smem:[#allocation2 + $0x33]]
        %344 = vrot.lane.b32.xlu0 %v223, 49
        %v345 = vpop.permute.xlu0 %344
        %346 = vrot.lane.b32.xlu0 %v230, 49
        %v347 = vpop.permute.xlu0 %346
        %348 = vrot.lane.b32.xlu0 0.0, 49
        %v349 = vpop.permute.xlu0 %348
        %vm350 = vcmp.lt.s32.totalorder %v269, 49
        %v351 = vsel %vm350, %v345, %v347
        %v352 = vsel %vm350, %v349, %v345
        %353 = vrot.lane.b32.xlu0 %v245, 49
        %v354 = vpop.permute.xlu0 %353
        %355 = vrot.lane.b32.xlu0 %v246, 49
        %v356 = vpop.permute.xlu0 %355
        %v357 = vsel %vm350, %v354, %v356
        %v358 = vsel %vm350, %v349, %v354
        %v359 = vstv %s342
        %v360 = vmul.f32 %v359, %v352
        %v361 = vmul.f32 %v359, %v351
        %v362 = vstv %s343
        %v363 = vmul.f32 %v362, %v358
        %v364 = vmul.f32 %v362, %v357
        %v365 = vadd.f32 %v360, %v363
        %v366 = vadd.f32 %v361, %v364
        %v368 = vlaneseq
        %v369 = vshrl.u32 %v368, 7
        %v370 = vsub.s32 0, %v369
        %v371 = vrot.slane %v251, %v370
        %v372 = vlaneseq
        %v373 = vshrl.u32 %v372, 7
        %v374 = vsub.s32 1, %v373
        %v375 = vrot.slane %v251, %v374
        %v378 = vmul.f32 %v365, %v371
        %v379 = vmul.f32 %v366, %v375
        %v380 = vadd.f32 %v340, %v378
        %v381 = vadd.f32 %v341, %v379
        %s382 = sld [smem:[#allocation2 + $0x3]]
        %s383 = sld [smem:[#allocation2 + $0x34]]
        %384 = vrot.lane.b32.xlu0 %v223, 48
        %v385 = vpop.permute.xlu0 %384
        %386 = vrot.lane.b32.xlu0 %v230, 48
        %v387 = vpop.permute.xlu0 %386
        %388 = vrot.lane.b32.xlu0 0.0, 48
        %v389 = vpop.permute.xlu0 %388
        %vm390 = vcmp.lt.s32.totalorder %v269, 48
        %v391 = vsel %vm390, %v385, %v387
        %v392 = vsel %vm390, %v389, %v385
        %393 = vrot.lane.b32.xlu0 %v245, 48
        %v394 = vpop.permute.xlu0 %393
        %395 = vrot.lane.b32.xlu0 %v246, 48
        %v396 = vpop.permute.xlu0 %395
        %v397 = vsel %vm390, %v394, %v396
        %v398 = vsel %vm390, %v389, %v394
        %v399 = vstv %s382
        %v400 = vmul.f32 %v399, %v392
        %v401 = vmul.f32 %v399, %v391
        %v402 = vstv %s383
        %v403 = vmul.f32 %v402, %v398
        %v404 = vmul.f32 %v402, %v397
        %v405 = vadd.f32 %v400, %v403
        %v406 = vadd.f32 %v401, %v404
        %v408 = vlaneseq
        %v409 = vshrl.u32 %v408, 7
        %v410 = vsub.s32 0, %v409
        %v411 = vrot.slane %v253, %v410
        %v412 = vlaneseq
        %v413 = vshrl.u32 %v412, 7
        %v414 = vsub.s32 1, %v413
        %v415 = vrot.slane %v253, %v414
        %v418 = vmul.f32 %v405, %v411
        %v419 = vmul.f32 %v406, %v415
        %v420 = vadd.f32 %v380, %v418
        %v421 = vadd.f32 %v381, %v419
        %s422 = sld [smem:[#allocation2 + $0x4]]
        %s423 = sld [smem:[#allocation2 + $0x35]]
        %424 = vrot.lane.b32.xlu0 %v223, 47
        %v425 = vpop.permute.xlu0 %424
        %426 = vrot.lane.b32.xlu0 %v230, 47
        %v427 = vpop.permute.xlu0 %426
        %428 = vrot.lane.b32.xlu0 0.0, 47
        %v429 = vpop.permute.xlu0 %428
        %vm430 = vcmp.lt.s32.totalorder %v269, 47
        %v431 = vsel %vm430, %v425, %v427
        %v432 = vsel %vm430, %v429, %v425
        %433 = vrot.lane.b32.xlu0 %v245, 47
        %v434 = vpop.permute.xlu0 %433
        %435 = vrot.lane.b32.xlu0 %v246, 47
        %v436 = vpop.permute.xlu0 %435
        %v437 = vsel %vm430, %v434, %v436
        %v438 = vsel %vm430, %v429, %v434
        %v439 = vstv %s422
        %v440 = vmul.f32 %v439, %v432
        %v441 = vmul.f32 %v439, %v431
        %v442 = vstv %s423
        %v443 = vmul.f32 %v442, %v438
        %v444 = vmul.f32 %v442, %v437
        %v445 = vadd.f32 %v440, %v443
        %v446 = vadd.f32 %v441, %v444
        %v448 = vlaneseq
        %v449 = vshrl.u32 %v448, 7
        %v450 = vsub.s32 0, %v449
        %v451 = vrot.slane %v255, %v450
        %v452 = vlaneseq
        %v453 = vshrl.u32 %v452, 7
        %v454 = vsub.s32 1, %v453
        %v455 = vrot.slane %v255, %v454
        %v458 = vmul.f32 %v445, %v451
        %v459 = vmul.f32 %v446, %v455
        %v460 = vadd.f32 %v420, %v458
        %v461 = vadd.f32 %v421, %v459
        %s462 = sld [smem:[#allocation2 + $0x5]]
        %s463 = sld [smem:[#allocation2 + $0x36]]
        %464 = vrot.lane.b32.xlu0 %v223, 46
        %v465 = vpop.permute.xlu0 %464
        %466 = vrot.lane.b32.xlu0 %v230, 46
        %v467 = vpop.permute.xlu0 %466
        %468 = vrot.lane.b32.xlu0 0.0, 46
        %v469 = vpop.permute.xlu0 %468
        %vm470 = vcmp.lt.s32.totalorder %v269, 46
        %v471 = vsel %vm470, %v465, %v467
        %v472 = vsel %vm470, %v469, %v465
        %473 = vrot.lane.b32.xlu0 %v245, 46
        %v474 = vpop.permute.xlu0 %473
        %475 = vrot.lane.b32.xlu0 %v246, 46
        %v476 = vpop.permute.xlu0 %475
        %v477 = vsel %vm470, %v474, %v476
        %v478 = vsel %vm470, %v469, %v474
        %v479 = vstv %s462
        %v480 = vmul.f32 %v479, %v472
        %v481 = vmul.f32 %v479, %v471
        %v482 = vstv %s463
        %v483 = vmul.f32 %v482, %v478
        %v484 = vmul.f32 %v482, %v477
        %v485 = vadd.f32 %v480, %v483
        %v486 = vadd.f32 %v481, %v484
        %v488 = vlaneseq
        %v489 = vshrl.u32 %v488, 7
        %v490 = vsub.s32 0, %v489
        %v491 = vrot.slane %v257, %v490
        %v492 = vlaneseq
        %v493 = vshrl.u32 %v492, 7
        %v494 = vsub.s32 1, %v493
        %v495 = vrot.slane %v257, %v494
        %v498 = vmul.f32 %v485, %v491
        %v499 = vmul.f32 %v486, %v495
        %v500 = vadd.f32 %v460, %v498
        %v501 = vadd.f32 %v461, %v499
        %s502 = sld [smem:[#allocation2 + $0x6]]
        %s503 = sld [smem:[#allocation2 + $0x37]]
        %504 = vrot.lane.b32.xlu0 %v223, 45
        %v505 = vpop.permute.xlu0 %504
        %506 = vrot.lane.b32.xlu0 %v230, 45
        %v507 = vpop.permute.xlu0 %506
        %508 = vrot.lane.b32.xlu0 0.0, 45
        %v509 = vpop.permute.xlu0 %508
        %vm510 = vcmp.lt.s32.totalorder %v269, 45
        %v511 = vsel %vm510, %v505, %v507
        %v512 = vsel %vm510, %v509, %v505
        %513 = vrot.lane.b32.xlu0 %v245, 45
        %v514 = vpop.permute.xlu0 %513
        %515 = vrot.lane.b32.xlu0 %v246, 45
        %v516 = vpop.permute.xlu0 %515
        %v517 = vsel %vm510, %v514, %v516
        %v518 = vsel %vm510, %v509, %v514
        %v519 = vstv %s502
        %v520 = vmul.f32 %v519, %v512
        %v521 = vmul.f32 %v519, %v511
        %v522 = vstv %s503
        %v523 = vmul.f32 %v522, %v518
        %v524 = vmul.f32 %v522, %v517
        %v525 = vadd.f32 %v520, %v523
        %v526 = vadd.f32 %v521, %v524
        %v528 = vlaneseq
        %v529 = vshrl.u32 %v528, 7
        %v530 = vsub.s32 0, %v529
        %v531 = vrot.slane %v259, %v530
        %v532 = vlaneseq
        %v533 = vshrl.u32 %v532, 7
        %v534 = vsub.s32 1, %v533
        %v535 = vrot.slane %v259, %v534
        %v538 = vmul.f32 %v525, %v531
        %v539 = vmul.f32 %v526, %v535
        %v540 = vadd.f32 %v500, %v538
        %v541 = vadd.f32 %v501, %v539
        %s542 = sld [smem:[#allocation2 + $0x7]]
        %s543 = sld [smem:[#allocation2 + $0x38]]
        %544 = vrot.lane.b32.xlu0 %v223, 35
        %v545 = vpop.permute.xlu0 %544
        %546 = vrot.lane.b32.xlu0 %v230, 35
        %v547 = vpop.permute.xlu0 %546
        %548 = vrot.lane.b32.xlu0 0.0, 35
        %v549 = vpop.permute.xlu0 %548
        %vm550 = vcmp.lt.s32.totalorder %v269, 35
        %v551 = vsel %vm550, %v545, %v547
        %v552 = vsel %vm550, %v549, %v545
        %553 = vrot.lane.b32.xlu0 %v245, 35
        %v554 = vpop.permute.xlu0 %553
        %555 = vrot.lane.b32.xlu0 %v246, 35
        %v556 = vpop.permute.xlu0 %555
        %v557 = vsel %vm550, %v554, %v556
        %v558 = vsel %vm550, %v549, %v554
        %v559 = vstv %s542
        %v560 = vmul.f32 %v559, %v552
        %v561 = vmul.f32 %v559, %v551
        %v562 = vstv %s543
        %v563 = vmul.f32 %v562, %v558
        %v564 = vmul.f32 %v562, %v557
        %v565 = vadd.f32 %v560, %v563
        %v566 = vadd.f32 %v561, %v564
        %v567 = vmul.f32 %v565, %v291
        %v568 = vmul.f32 %v566, %v295
        %v569 = vadd.f32 %v540, %v567
        %v570 = vadd.f32 %v541, %v568
        %s571 = sld [smem:[#allocation2 + $0x8]]
        %s572 = sld [smem:[#allocation2 + $0x39]]
        %573 = vrot.lane.b32.xlu0 %v223, 34
        %v574 = vpop.permute.xlu0 %573
        %575 = vrot.lane.b32.xlu0 %v230, 34
        %v576 = vpop.permute.xlu0 %575
        %577 = vrot.lane.b32.xlu0 0.0, 34
        %v578 = vpop.permute.xlu0 %577
        %vm579 = vcmp.lt.s32.totalorder %v269, 34
        %v580 = vsel %vm579, %v574, %v576
        %v581 = vsel %vm579, %v578, %v574
        %582 = vrot.lane.b32.xlu0 %v245, 34
        %v583 = vpop.permute.xlu0 %582
        %584 = vrot.lane.b32.xlu0 %v246, 34
        %v585 = vpop.permute.xlu0 %584
        %v586 = vsel %vm579, %v583, %v585
        %v587 = vsel %vm579, %v578, %v583
        %v588 = vstv %s571
        %v589 = vmul.f32 %v588, %v581
        %v590 = vmul.f32 %v588, %v580
        %v591 = vstv %s572
        %v592 = vmul.f32 %v591, %v587
        %v593 = vmul.f32 %v591, %v586
        %v594 = vadd.f32 %v589, %v592
        %v595 = vadd.f32 %v590, %v593
        %v596 = vmul.f32 %v594, %v331
        %v597 = vmul.f32 %v595, %v335
        %v598 = vadd.f32 %v569, %v596
        %v599 = vadd.f32 %v570, %v597
        %s600 = sld [smem:[#allocation2 + $0x9]]
        %s601 = sld [smem:[#allocation2 + $0x3a]]
        %602 = vrot.lane.b32.xlu0 %v223, 33
        %v603 = vpop.permute.xlu0 %602
        %604 = vrot.lane.b32.xlu0 %v230, 33
        %v605 = vpop.permute.xlu0 %604
        %606 = vrot.lane.b32.xlu0 0.0, 33
        %v607 = vpop.permute.xlu0 %606
        %vm608 = vcmp.lt.s32.totalorder %v269, 33
        %v609 = vsel %vm608, %v603, %v605
        %v610 = vsel %vm608, %v607, %v603
        %611 = vrot.lane.b32.xlu0 %v245, 33
        %v612 = vpop.permute.xlu0 %611
        %613 = vrot.lane.b32.xlu0 %v246, 33
        %v614 = vpop.permute.xlu0 %613
        %v615 = vsel %vm608, %v612, %v614
        %v616 = vsel %vm608, %v607, %v612
        %v617 = vstv %s600
        %v618 = vmul.f32 %v617, %v610
        %v619 = vmul.f32 %v617, %v609
        %v620 = vstv %s601
        %v621 = vmul.f32 %v620, %v616
        %v622 = vmul.f32 %v620, %v615
        %v623 = vadd.f32 %v618, %v621
        %v624 = vadd.f32 %v619, %v622
        %v625 = vmul.f32 %v623, %v371
        %v626 = vmul.f32 %v624, %v375
        %v627 = vadd.f32 %v598, %v625
        %v628 = vadd.f32 %v599, %v626
        %s629 = sld [smem:[#allocation2 + $0xa]]
        %s630 = sld [smem:[#allocation2 + $0x3b]]
        %631 = vrot.lane.b32.xlu0 %v223, 32
        %v632 = vpop.permute.xlu0 %631
        %633 = vrot.lane.b32.xlu0 %v230, 32
        %v634 = vpop.permute.xlu0 %633
        %635 = vrot.lane.b32.xlu0 0.0, 32
        %v636 = vpop.permute.xlu0 %635
        %vm637 = vcmp.lt.s32.totalorder %v269, 32
        %v638 = vsel %vm637, %v632, %v634
        %v639 = vsel %vm637, %v636, %v632
        %640 = vrot.lane.b32.xlu0 %v245, 32
        %v641 = vpop.permute.xlu0 %640
        %642 = vrot.lane.b32.xlu0 %v246, 32
        %v643 = vpop.permute.xlu0 %642
        %v644 = vsel %vm637, %v641, %v643
        %v645 = vsel %vm637, %v636, %v641
        %v646 = vstv %s629
        %v647 = vmul.f32 %v646, %v639
        %v648 = vmul.f32 %v646, %v638
        %v649 = vstv %s630
        %v650 = vmul.f32 %v649, %v645
        %v651 = vmul.f32 %v649, %v644
        %v652 = vadd.f32 %v647, %v650
        %v653 = vadd.f32 %v648, %v651
        %v654 = vmul.f32 %v652, %v411
        %v655 = vmul.f32 %v653, %v415
        %v656 = vadd.f32 %v627, %v654
        %v657 = vadd.f32 %v628, %v655
        %s658 = sld [smem:[#allocation2 + $0xb]]
        %s659 = sld [smem:[#allocation2 + $0x3c]]
        %660 = vrot.lane.b32.xlu0 %v223, 31
        %v661 = vpop.permute.xlu0 %660
        %662 = vrot.lane.b32.xlu0 %v230, 31
        %v663 = vpop.permute.xlu0 %662
        %664 = vrot.lane.b32.xlu0 0.0, 31
        %v665 = vpop.permute.xlu0 %664
        %vm666 = vcmp.lt.s32.totalorder %v269, 31
        %v667 = vsel %vm666, %v661, %v663
        %v668 = vsel %vm666, %v665, %v661
        %669 = vrot.lane.b32.xlu0 %v245, 31
        %v670 = vpop.permute.xlu0 %669
        %671 = vrot.lane.b32.xlu0 %v246, 31
        %v672 = vpop.permute.xlu0 %671
        %v673 = vsel %vm666, %v670, %v672
        %v674 = vsel %vm666, %v665, %v670
        %v675 = vstv %s658
        %v676 = vmul.f32 %v675, %v668
        %v677 = vmul.f32 %v675, %v667
        %v678 = vstv %s659
        %v679 = vmul.f32 %v678, %v674
        %v680 = vmul.f32 %v678, %v673
        %v681 = vadd.f32 %v676, %v679
        %v682 = vadd.f32 %v677, %v680
        %v683 = vmul.f32 %v681, %v451
        %v684 = vmul.f32 %v682, %v455
        %v685 = vadd.f32 %v656, %v683
        %v686 = vadd.f32 %v657, %v684
        %s687 = sld [smem:[#allocation2 + $0xc]]
        %s688 = sld [smem:[#allocation2 + $0x3d]]
        %689 = vrot.lane.b32.xlu0 %v223, 30
        %v690 = vpop.permute.xlu0 %689
        %691 = vrot.lane.b32.xlu0 %v230, 30
        %v692 = vpop.permute.xlu0 %691
        %693 = vrot.lane.b32.xlu0 0.0, 30
        %v694 = vpop.permute.xlu0 %693
        %vm695 = vcmp.lt.s32.totalorder %v269, 30
        %v696 = vsel %vm695, %v690, %v692
        %v697 = vsel %vm695, %v694, %v690
        %698 = vrot.lane.b32.xlu0 %v245, 30
        %v699 = vpop.permute.xlu0 %698
        %700 = vrot.lane.b32.xlu0 %v246, 30
        %v701 = vpop.permute.xlu0 %700
        %v702 = vsel %vm695, %v699, %v701
        %v703 = vsel %vm695, %v694, %v699
        %v704 = vstv %s687
        %v705 = vmul.f32 %v704, %v697
        %v706 = vmul.f32 %v704, %v696
        %v707 = vstv %s688
        %v708 = vmul.f32 %v707, %v703
        %v709 = vmul.f32 %v707, %v702
        %v710 = vadd.f32 %v705, %v708
        %v711 = vadd.f32 %v706, %v709
        %v712 = vmul.f32 %v710, %v491
        %v713 = vmul.f32 %v711, %v495
        %v714 = vadd.f32 %v685, %v712
        %v715 = vadd.f32 %v686, %v713
        %s716 = sld [smem:[#allocation2 + $0xd]]
        %s717 = sld [smem:[#allocation2 + $0x3e]]
        %718 = vrot.lane.b32.xlu0 %v223, 29
        %v719 = vpop.permute.xlu0 %718
        %720 = vrot.lane.b32.xlu0 %v230, 29
        %v721 = vpop.permute.xlu0 %720
        %722 = vrot.lane.b32.xlu0 0.0, 29
        %v723 = vpop.permute.xlu0 %722
        %vm724 = vcmp.lt.s32.totalorder %v269, 29
        %v725 = vsel %vm724, %v719, %v721
        %v726 = vsel %vm724, %v723, %v719
        %727 = vrot.lane.b32.xlu0 %v245, 29
        %v728 = vpop.permute.xlu0 %727
        %729 = vrot.lane.b32.xlu0 %v246, 29
        %v730 = vpop.permute.xlu0 %729
        %v731 = vsel %vm724, %v728, %v730
        %v732 = vsel %vm724, %v723, %v728
        %v733 = vstv %s716
        %v734 = vmul.f32 %v733, %v726
        %v735 = vmul.f32 %v733, %v725
        %v736 = vstv %s717
        %v737 = vmul.f32 %v736, %v732
        %v738 = vmul.f32 %v736, %v731
        %v739 = vadd.f32 %v734, %v737
        %v740 = vadd.f32 %v735, %v738
        %v741 = vmul.f32 %v739, %v531
        %v742 = vmul.f32 %v740, %v535
        %v743 = vadd.f32 %v714, %v741
        %v744 = vadd.f32 %v715, %v742
        %s745 = sld [smem:[#allocation2 + $0xe]]
        %s746 = sld [smem:[#allocation2 + $0x3f]]
        %747 = vrot.lane.b32.xlu0 %v223, 19
        %v748 = vpop.permute.xlu0 %747
        %749 = vrot.lane.b32.xlu0 %v230, 19
        %v750 = vpop.permute.xlu0 %749
        %751 = vrot.lane.b32.xlu0 0.0, 19
        %v752 = vpop.permute.xlu0 %751
        %vm753 = vcmp.lt.s32.totalorder %v269, 19
        %v754 = vsel %vm753, %v748, %v750
        %v755 = vsel %vm753, %v752, %v748
        %756 = vrot.lane.b32.xlu0 %v245, 19
        %v757 = vpop.permute.xlu0 %756
        %758 = vrot.lane.b32.xlu0 %v246, 19
        %v759 = vpop.permute.xlu0 %758
        %v760 = vsel %vm753, %v757, %v759
        %v761 = vsel %vm753, %v752, %v757
        %v762 = vstv %s745
        %v763 = vmul.f32 %v762, %v755
        %v764 = vmul.f32 %v762, %v754
        %v765 = vstv %s746
        %v766 = vmul.f32 %v765, %v761
        %v767 = vmul.f32 %v765, %v760
        %v768 = vadd.f32 %v763, %v766
        %v769 = vadd.f32 %v764, %v767
        %v770 = vmul.f32 %v768, %v291
        %v771 = vmul.f32 %v769, %v295
        %v772 = vadd.f32 %v743, %v770
        %v773 = vadd.f32 %v744, %v771
        %s774 = sld [smem:[#allocation2 + $0xf]]
        %s775 = sld [smem:[#allocation2 + $0x40]]
        %776 = vrot.lane.b32.xlu0 %v223, 18
        %v777 = vpop.permute.xlu0 %776
        %778 = vrot.lane.b32.xlu0 %v230, 18
        %v779 = vpop.permute.xlu0 %778
        %780 = vrot.lane.b32.xlu0 0.0, 18
        %v781 = vpop.permute.xlu0 %780
        %vm782 = vcmp.lt.s32.totalorder %v269, 18
        %v783 = vsel %vm782, %v777, %v779
        %v784 = vsel %vm782, %v781, %v777
        %785 = vrot.lane.b32.xlu0 %v245, 18
        %v786 = vpop.permute.xlu0 %785
        %787 = vrot.lane.b32.xlu0 %v246, 18
        %v788 = vpop.permute.xlu0 %787
        %v789 = vsel %vm782, %v786, %v788
        %v790 = vsel %vm782, %v781, %v786
        %v791 = vstv %s774
        %v792 = vmul.f32 %v791, %v784
        %v793 = vmul.f32 %v791, %v783
        %v794 = vstv %s775
        %v795 = vmul.f32 %v794, %v790
        %v796 = vmul.f32 %v794, %v789
        %v797 = vadd.f32 %v792, %v795
        %v798 = vadd.f32 %v793, %v796
        %v799 = vmul.f32 %v797, %v331
        %v800 = vmul.f32 %v798, %v335
        %v801 = vadd.f32 %v772, %v799
        %v802 = vadd.f32 %v773, %v800
        %s803 = sld [smem:[#allocation2 + $0x10]]
        %s804 = sld [smem:[#allocation2 + $0x41]]
        %805 = vrot.lane.b32.xlu0 %v223, 17
        %v806 = vpop.permute.xlu0 %805
        %807 = vrot.lane.b32.xlu0 %v230, 17
        %v808 = vpop.permute.xlu0 %807
        %809 = vrot.lane.b32.xlu0 0.0, 17
        %v810 = vpop.permute.xlu0 %809
        %vm811 = vcmp.lt.s32.totalorder %v269, 17
        %v812 = vsel %vm811, %v806, %v808
        %v813 = vsel %vm811, %v810, %v806
        %814 = vrot.lane.b32.xlu0 %v245, 17
        %v815 = vpop.permute.xlu0 %814
        %816 = vrot.lane.b32.xlu0 %v246, 17
        %v817 = vpop.permute.xlu0 %816
        %v818 = vsel %vm811, %v815, %v817
        %v819 = vsel %vm811, %v810, %v815
        %v820 = vstv %s803
        %v821 = vmul.f32 %v820, %v813
        %v822 = vmul.f32 %v820, %v812
        %v823 = vstv %s804
        %v824 = vmul.f32 %v823, %v819
        %v825 = vmul.f32 %v823, %v818
        %v826 = vadd.f32 %v821, %v824
        %v827 = vadd.f32 %v822, %v825
        %v828 = vmul.f32 %v826, %v371
        %v829 = vmul.f32 %v827, %v375
        %v830 = vadd.f32 %v801, %v828
        %v831 = vadd.f32 %v802, %v829
        %s832 = sld [smem:[#allocation2 + $0x11]]
        %s833 = sld [smem:[#allocation2 + $0x42]]
        %834 = vrot.lane.b32.xlu0 %v223, 16
        %v835 = vpop.permute.xlu0 %834
        %836 = vrot.lane.b32.xlu0 %v230, 16
        %v837 = vpop.permute.xlu0 %836
        %838 = vrot.lane.b32.xlu0 0.0, 16
        %v839 = vpop.permute.xlu0 %838
        %vm840 = vcmp.lt.s32.totalorder %v269, 16
        %v841 = vsel %vm840, %v835, %v837
        %v842 = vsel %vm840, %v839, %v835
        %843 = vrot.lane.b32.xlu0 %v245, 16
        %v844 = vpop.permute.xlu0 %843
        %845 = vrot.lane.b32.xlu0 %v246, 16
        %v846 = vpop.permute.xlu0 %845
        %v847 = vsel %vm840, %v844, %v846
        %v848 = vsel %vm840, %v839, %v844
        %v849 = vstv %s832
        %v850 = vmul.f32 %v849, %v842
        %v851 = vmul.f32 %v849, %v841
        %v852 = vstv %s833
        %v853 = vmul.f32 %v852, %v848
        %v854 = vmul.f32 %v852, %v847
        %v855 = vadd.f32 %v850, %v853
        %v856 = vadd.f32 %v851, %v854
        %v857 = vmul.f32 %v855, %v411
        %v858 = vmul.f32 %v856, %v415
        %v859 = vadd.f32 %v830, %v857
        %v860 = vadd.f32 %v831, %v858
        %s861 = sld [smem:[#allocation2 + $0x12]]
        %s862 = sld [smem:[#allocation2 + $0x43]]
        %863 = vrot.lane.b32.xlu0 %v223, 15
        %v864 = vpop.permute.xlu0 %863
        %865 = vrot.lane.b32.xlu0 %v230, 15
        %v866 = vpop.permute.xlu0 %865
        %867 = vrot.lane.b32.xlu0 0.0, 15
        %v868 = vpop.permute.xlu0 %867
        %vm869 = vcmp.lt.s32.totalorder %v269, 15
        %v870 = vsel %vm869, %v864, %v866
        %v871 = vsel %vm869, %v868, %v864
        %872 = vrot.lane.b32.xlu0 %v245, 15
        %v873 = vpop.permute.xlu0 %872
        %874 = vrot.lane.b32.xlu0 %v246, 15
        %v875 = vpop.permute.xlu0 %874
        %v876 = vsel %vm869, %v873, %v875
        %v877 = vsel %vm869, %v868, %v873
        %v878 = vstv %s861
        %v879 = vmul.f32 %v878, %v871
        %v880 = vmul.f32 %v878, %v870
        %v881 = vstv %s862
        %v882 = vmul.f32 %v881, %v877
        %v883 = vmul.f32 %v881, %v876
        %v884 = vadd.f32 %v879, %v882
        %v885 = vadd.f32 %v880, %v883
        %v886 = vmul.f32 %v884, %v451
        %v887 = vmul.f32 %v885, %v455
        %v888 = vadd.f32 %v859, %v886
        %v889 = vadd.f32 %v860, %v887
        %s890 = sld [smem:[#allocation2 + $0x13]]
        %s891 = sld [smem:[#allocation2 + $0x44]]
        %892 = vrot.lane.b32.xlu0 %v223, 14
        %v893 = vpop.permute.xlu0 %892
        %894 = vrot.lane.b32.xlu0 %v230, 14
        %v895 = vpop.permute.xlu0 %894
        %896 = vrot.lane.b32.xlu0 0.0, 14
        %v897 = vpop.permute.xlu0 %896
        %vm898 = vcmp.lt.s32.totalorder %v269, 14
        %v899 = vsel %vm898, %v893, %v895
        %v900 = vsel %vm898, %v897, %v893
        %901 = vrot.lane.b32.xlu0 %v245, 14
        %v902 = vpop.permute.xlu0 %901
        %903 = vrot.lane.b32.xlu0 %v246, 14
        %v904 = vpop.permute.xlu0 %903
        %v905 = vsel %vm898, %v902, %v904
        %v906 = vsel %vm898, %v897, %v902
        %v907 = vstv %s890
        %v908 = vmul.f32 %v907, %v900
        %v909 = vmul.f32 %v907, %v899
        %v910 = vstv %s891
        %v911 = vmul.f32 %v910, %v906
        %v912 = vmul.f32 %v910, %v905
        %v913 = vadd.f32 %v908, %v911
        %v914 = vadd.f32 %v909, %v912
        %v915 = vmul.f32 %v913, %v491
        %v916 = vmul.f32 %v914, %v495
        %v917 = vadd.f32 %v888, %v915
        %v918 = vadd.f32 %v889, %v916
        %s919 = sld [smem:[#allocation2 + $0x14]]
        %s920 = sld [smem:[#allocation2 + $0x45]]
        %921 = vrot.lane.b32.xlu0 %v223, 13
        %v922 = vpop.permute.xlu0 %921
        %923 = vrot.lane.b32.xlu0 %v230, 13
        %v924 = vpop.permute.xlu0 %923
        %925 = vrot.lane.b32.xlu0 0.0, 13
        %v926 = vpop.permute.xlu0 %925
        %vm927 = vcmp.lt.s32.totalorder %v269, 13
        %v928 = vsel %vm927, %v922, %v924
        %v929 = vsel %vm927, %v926, %v922
        %930 = vrot.lane.b32.xlu0 %v245, 13
        %v931 = vpop.permute.xlu0 %930
        %932 = vrot.lane.b32.xlu0 %v246, 13
        %v933 = vpop.permute.xlu0 %932
        %v934 = vsel %vm927, %v931, %v933
        %v935 = vsel %vm927, %v926, %v931
        %v936 = vstv %s919
        %v937 = vmul.f32 %v936, %v929
        %v938 = vmul.f32 %v936, %v928
        %v939 = vstv %s920
        %v940 = vmul.f32 %v939, %v935
        %v941 = vmul.f32 %v939, %v934
        %v942 = vadd.f32 %v937, %v940
        %v943 = vadd.f32 %v938, %v941
        %v944 = vmul.f32 %v942, %v531
        %v945 = vmul.f32 %v943, %v535
        %v946 = vadd.f32 %v917, %v944
        %v947 = vadd.f32 %v918, %v945
        %s948 = sld [smem:[#allocation2 + $0x15]]
        %s949 = sld [smem:[#allocation2 + $0x46]]
        %950 = vrot.lane.b32.xlu0 %v223, 3
        %v951 = vpop.permute.xlu0 %950
        %952 = vrot.lane.b32.xlu0 %v230, 3
        %v953 = vpop.permute.xlu0 %952
        %954 = vrot.lane.b32.xlu0 0.0, 3
        %v955 = vpop.permute.xlu0 %954
        %vm956 = vcmp.lt.s32.totalorder %v269, 3
        %v957 = vsel %vm956, %v951, %v953
        %v958 = vsel %vm956, %v955, %v951
        %959 = vrot.lane.b32.xlu0 %v245, 3
        %v960 = vpop.permute.xlu0 %959
        %961 = vrot.lane.b32.xlu0 %v246, 3
        %v962 = vpop.permute.xlu0 %961
        %v963 = vsel %vm956, %v960, %v962
        %v964 = vsel %vm956, %v955, %v960
        %v965 = vstv %s948
        %v966 = vmul.f32 %v965, %v958
        %v967 = vmul.f32 %v965, %v957
        %v968 = vstv %s949
        %v969 = vmul.f32 %v968, %v964
        %v970 = vmul.f32 %v968, %v963
        %v971 = vadd.f32 %v966, %v969
        %v972 = vadd.f32 %v967, %v970
        %v973 = vmul.f32 %v971, %v291
        %v974 = vmul.f32 %v972, %v295
        %v975 = vadd.f32 %v946, %v973
        %v976 = vadd.f32 %v947, %v974
        %s977 = sld [smem:[#allocation2 + $0x16]]
        %s978 = sld [smem:[#allocation2 + $0x47]]
        %979 = vrot.lane.b32.xlu0 %v223, 2
        %v980 = vpop.permute.xlu0 %979
        %981 = vrot.lane.b32.xlu0 %v230, 2
        %v982 = vpop.permute.xlu0 %981
        %983 = vrot.lane.b32.xlu0 0.0, 2
        %v984 = vpop.permute.xlu0 %983
        %vm985 = vcmp.lt.s32.totalorder %v269, 2
        %v986 = vsel %vm985, %v980, %v982
        %v987 = vsel %vm985, %v984, %v980
        %988 = vrot.lane.b32.xlu0 %v245, 2
        %v989 = vpop.permute.xlu0 %988
        %990 = vrot.lane.b32.xlu0 %v246, 2
        %v991 = vpop.permute.xlu0 %990
        %v992 = vsel %vm985, %v989, %v991
        %v993 = vsel %vm985, %v984, %v989
        %v994 = vstv %s977
        %v995 = vmul.f32 %v994, %v987
        %v996 = vmul.f32 %v994, %v986
        %v997 = vstv %s978
        %v998 = vmul.f32 %v997, %v993
        %v999 = vmul.f32 %v997, %v992
        %v1000 = vadd.f32 %v995, %v998
        %v1001 = vadd.f32 %v996, %v999
        %v1002 = vmul.f32 %v1000, %v331
        %v1003 = vmul.f32 %v1001, %v335
        %v1004 = vadd.f32 %v975, %v1002
        %v1005 = vadd.f32 %v976, %v1003
        %s1006 = sld [smem:[#allocation2 + $0x17]]
        %s1007 = sld [smem:[#allocation2 + $0x48]]
        %1008 = vrot.lane.b32.xlu0 %v223, 1
        %v1009 = vpop.permute.xlu0 %1008
        %1010 = vrot.lane.b32.xlu0 %v230, 1
        %v1011 = vpop.permute.xlu0 %1010
        %1012 = vrot.lane.b32.xlu0 0.0, 1
        %v1013 = vpop.permute.xlu0 %1012
        %vm1014 = vcmp.lt.s32.totalorder %v269, 1
        %v1015 = vsel %vm1014, %v1009, %v1011
        %v1016 = vsel %vm1014, %v1013, %v1009
        %1017 = vrot.lane.b32.xlu0 %v245, 1
        %v1018 = vpop.permute.xlu0 %1017
        %1019 = vrot.lane.b32.xlu0 %v246, 1
        %v1020 = vpop.permute.xlu0 %1019
        %v1021 = vsel %vm1014, %v1018, %v1020
        %v1022 = vsel %vm1014, %v1013, %v1018
        %v1023 = vstv %s1006
        %v1024 = vmul.f32 %v1023, %v1016
        %v1025 = vmul.f32 %v1023, %v1015
        %v1026 = vstv %s1007
        %v1027 = vmul.f32 %v1026, %v1022
        %v1028 = vmul.f32 %v1026, %v1021
        %v1029 = vadd.f32 %v1024, %v1027
        %v1030 = vadd.f32 %v1025, %v1028
        %v1031 = vmul.f32 %v1029, %v371
        %v1032 = vmul.f32 %v1030, %v375
        %v1033 = vadd.f32 %v1004, %v1031
        %v1034 = vadd.f32 %v1005, %v1032
        %s1035 = sld [smem:[#allocation2 + $0x18]]
        %s1036 = sld [smem:[#allocation2 + $0x49]]
        %v1037 = vstv %s1035
        %v1038 = vmul.f32 %v1037, %v223
        %v1039 = vmul.f32 %v1037, %v230
        %v1040 = vstv %s1036
        %v1041 = vmul.f32 %v1040, %v245
        %v1042 = vmul.f32 %v1040, %v246
        %v1043 = vadd.f32 %v1038, %v1041
        %v1044 = vadd.f32 %v1039, %v1042
        %v1045 = vmul.f32 %v1043, %v411
        %v1046 = vmul.f32 %v1044, %v415
        %v1047 = vadd.f32 %v1033, %v1045
        %v1048 = vadd.f32 %v1034, %v1046
        %s1049 = sld [smem:[#allocation2 + $0x19]]
        %s1050 = sld [smem:[#allocation2 + $0x4a]]
        %1051 = vrot.lane.b32.xlu0 %v223, 127
        %v1052 = vpop.permute.xlu0 %1051
        %1053 = vrot.lane.b32.xlu0 %v230, 127
        %v1054 = vpop.permute.xlu0 %1053
        %1055 = vrot.lane.b32.xlu0 0.0, 127
        %v1056 = vpop.permute.xlu0 %1055
        %vm1057 = vcmp.lt.s32.totalorder %v269, 127
        %v1058 = vsel %vm1057, %v1054, %v1056
        %v1059 = vsel %vm1057, %v1052, %v1054
        %1060 = vrot.lane.b32.xlu0 %v245, 127
        %v1061 = vpop.permute.xlu0 %1060
        %1062 = vrot.lane.b32.xlu0 %v246, 127
        %v1063 = vpop.permute.xlu0 %1062
        %v1064 = vsel %vm1057, %v1063, %v1056
        %v1065 = vsel %vm1057, %v1061, %v1063
        %v1066 = vstv %s1049
        %v1067 = vmul.f32 %v1066, %v1059
        %v1068 = vmul.f32 %v1066, %v1058
        %v1069 = vstv %s1050
        %v1070 = vmul.f32 %v1069, %v1065
        %v1071 = vmul.f32 %v1069, %v1064
        %v1072 = vadd.f32 %v1067, %v1070
        %v1073 = vadd.f32 %v1068, %v1071
        %v1074 = vmul.f32 %v1072, %v451
        %v1075 = vmul.f32 %v1073, %v455
        %v1076 = vadd.f32 %v1047, %v1074
        %v1077 = vadd.f32 %v1048, %v1075
        %s1078 = sld [smem:[#allocation2 + $0x1a]]
        %s1079 = sld [smem:[#allocation2 + $0x4b]]
        %1080 = vrot.lane.b32.xlu0 %v223, 126
        %v1081 = vpop.permute.xlu0 %1080
        %1082 = vrot.lane.b32.xlu0 %v230, 126
        %v1083 = vpop.permute.xlu0 %1082
        %1084 = vrot.lane.b32.xlu0 0.0, 126
        %v1085 = vpop.permute.xlu0 %1084
        %vm1086 = vcmp.lt.s32.totalorder %v269, 126
        %v1087 = vsel %vm1086, %v1083, %v1085
        %v1088 = vsel %vm1086, %v1081, %v1083
        %1089 = vrot.lane.b32.xlu0 %v245, 126
        %v1090 = vpop.permute.xlu0 %1089
        %1091 = vrot.lane.b32.xlu0 %v246, 126
        %v1092 = vpop.permute.xlu0 %1091
        %v1093 = vsel %vm1086, %v1092, %v1085
        %v1094 = vsel %vm1086, %v1090, %v1092
        %v1095 = vstv %s1078
        %v1096 = vmul.f32 %v1095, %v1088
        %v1097 = vmul.f32 %v1095, %v1087
        %v1098 = vstv %s1079
        %v1099 = vmul.f32 %v1098, %v1094
        %v1100 = vmul.f32 %v1098, %v1093
        %v1101 = vadd.f32 %v1096, %v1099
        %v1102 = vadd.f32 %v1097, %v1100
        %v1103 = vmul.f32 %v1101, %v491
        %v1104 = vmul.f32 %v1102, %v495
        %v1105 = vadd.f32 %v1076, %v1103
        %v1106 = vadd.f32 %v1077, %v1104
        %s1107 = sld [smem:[#allocation2 + $0x1b]]
        %s1108 = sld [smem:[#allocation2 + $0x4c]]
        %1109 = vrot.lane.b32.xlu0 %v223, 125
        %v1110 = vpop.permute.xlu0 %1109
        %1111 = vrot.lane.b32.xlu0 %v230, 125
        %v1112 = vpop.permute.xlu0 %1111
        %1113 = vrot.lane.b32.xlu0 0.0, 125
        %v1114 = vpop.permute.xlu0 %1113
        %vm1115 = vcmp.lt.s32.totalorder %v269, 125
        %v1116 = vsel %vm1115, %v1112, %v1114
        %v1117 = vsel %vm1115, %v1110, %v1112
        %1118 = vrot.lane.b32.xlu0 %v245, 125
        %v1119 = vpop.permute.xlu0 %1118
        %1120 = vrot.lane.b32.xlu0 %v246, 125
        %v1121 = vpop.permute.xlu0 %1120
        %v1122 = vsel %vm1115, %v1121, %v1114
        %v1123 = vsel %vm1115, %v1119, %v1121
        %v1124 = vstv %s1107
        %v1125 = vmul.f32 %v1124, %v1117
        %v1126 = vmul.f32 %v1124, %v1116
        %v1127 = vstv %s1108
        %v1128 = vmul.f32 %v1127, %v1123
        %v1129 = vmul.f32 %v1127, %v1122
        %v1130 = vadd.f32 %v1125, %v1128
        %v1131 = vadd.f32 %v1126, %v1129
        %v1132 = vmul.f32 %v1130, %v531
        %v1133 = vmul.f32 %v1131, %v535
        %v1134 = vadd.f32 %v1105, %v1132
        %v1135 = vadd.f32 %v1106, %v1133
        %s1136 = sld [smem:[#allocation2 + $0x1c]]
        %s1137 = sld [smem:[#allocation2 + $0x4d]]
        %1138 = vrot.lane.b32.xlu0 %v223, 115
        %v1139 = vpop.permute.xlu0 %1138
        %1140 = vrot.lane.b32.xlu0 %v230, 115
        %v1141 = vpop.permute.xlu0 %1140
        %1142 = vrot.lane.b32.xlu0 0.0, 115
        %v1143 = vpop.permute.xlu0 %1142
        %vm1144 = vcmp.lt.s32.totalorder %v269, 115
        %v1145 = vsel %vm1144, %v1141, %v1143
        %v1146 = vsel %vm1144, %v1139, %v1141
        %1147 = vrot.lane.b32.xlu0 %v245, 115
        %v1148 = vpop.permute.xlu0 %1147
        %1149 = vrot.lane.b32.xlu0 %v246, 115
        %v1150 = vpop.permute.xlu0 %1149
        %v1151 = vsel %vm1144, %v1150, %v1143
        %v1152 = vsel %vm1144, %v1148, %v1150
        %v1153 = vstv %s1136
        %v1154 = vmul.f32 %v1153, %v1146
        %v1155 = vmul.f32 %v1153, %v1145
        %v1156 = vstv %s1137
        %v1157 = vmul.f32 %v1156, %v1152
        %v1158 = vmul.f32 %v1156, %v1151
        %v1159 = vadd.f32 %v1154, %v1157
        %v1160 = vadd.f32 %v1155, %v1158
        %v1161 = vmul.f32 %v1159, %v291
        %v1162 = vmul.f32 %v1160, %v295
        %v1163 = vadd.f32 %v1134, %v1161
        %v1164 = vadd.f32 %v1135, %v1162
        %s1165 = sld [smem:[#allocation2 + $0x1d]]
        %s1166 = sld [smem:[#allocation2 + $0x4e]]
        %1167 = vrot.lane.b32.xlu0 %v223, 114
        %v1168 = vpop.permute.xlu0 %1167
        %1169 = vrot.lane.b32.xlu0 %v230, 114
        %v1170 = vpop.permute.xlu0 %1169
        %1171 = vrot.lane.b32.xlu0 0.0, 114
        %v1172 = vpop.permute.xlu0 %1171
        %vm1173 = vcmp.lt.s32.totalorder %v269, 114
        %v1174 = vsel %vm1173, %v1170, %v1172
        %v1175 = vsel %vm1173, %v1168, %v1170
        %1176 = vrot.lane.b32.xlu0 %v245, 114
        %v1177 = vpop.permute.xlu0 %1176
        %1178 = vrot.lane.b32.xlu0 %v246, 114
        %v1179 = vpop.permute.xlu0 %1178
        %v1180 = vsel %vm1173, %v1179, %v1172
        %v1181 = vsel %vm1173, %v1177, %v1179
        %v1182 = vstv %s1165
        %v1183 = vmul.f32 %v1182, %v1175
        %v1184 = vmul.f32 %v1182, %v1174
        %v1185 = vstv %s1166
        %v1186 = vmul.f32 %v1185, %v1181
        %v1187 = vmul.f32 %v1185, %v1180
        %v1188 = vadd.f32 %v1183, %v1186
        %v1189 = vadd.f32 %v1184, %v1187
        %v1190 = vmul.f32 %v1188, %v331
        %v1191 = vmul.f32 %v1189, %v335
        %v1192 = vadd.f32 %v1163, %v1190
        %v1193 = vadd.f32 %v1164, %v1191
        %s1194 = sld [smem:[#allocation2 + $0x1e]]
        %s1195 = sld [smem:[#allocation2 + $0x4f]]
        %1196 = vrot.lane.b32.xlu0 %v223, 113
        %v1197 = vpop.permute.xlu0 %1196
        %1198 = vrot.lane.b32.xlu0 %v230, 113
        %v1199 = vpop.permute.xlu0 %1198
        %1200 = vrot.lane.b32.xlu0 0.0, 113
        %v1201 = vpop.permute.xlu0 %1200
        %vm1202 = vcmp.lt.s32.totalorder %v269, 113
        %v1203 = vsel %vm1202, %v1199, %v1201
        %v1204 = vsel %vm1202, %v1197, %v1199
        %1205 = vrot.lane.b32.xlu0 %v245, 113
        %v1206 = vpop.permute.xlu0 %1205
        %1207 = vrot.lane.b32.xlu0 %v246, 113
        %v1208 = vpop.permute.xlu0 %1207
        %v1209 = vsel %vm1202, %v1208, %v1201
        %v1210 = vsel %vm1202, %v1206, %v1208
        %v1211 = vstv %s1194
        %v1212 = vmul.f32 %v1211, %v1204
        %v1213 = vmul.f32 %v1211, %v1203
        %v1214 = vstv %s1195
        %v1215 = vmul.f32 %v1214, %v1210
        %v1216 = vmul.f32 %v1214, %v1209
        %v1217 = vadd.f32 %v1212, %v1215
        %v1218 = vadd.f32 %v1213, %v1216
        %v1219 = vmul.f32 %v1217, %v371
        %v1220 = vmul.f32 %v1218, %v375
        %v1221 = vadd.f32 %v1192, %v1219
        %v1222 = vadd.f32 %v1193, %v1220
        %s1223 = sld [smem:[#allocation2 + $0x1f]]
        %s1224 = sld [smem:[#allocation2 + $0x50]]
        %1225 = vrot.lane.b32.xlu0 %v223, 112
        %v1226 = vpop.permute.xlu0 %1225
        %1227 = vrot.lane.b32.xlu0 %v230, 112
        %v1228 = vpop.permute.xlu0 %1227
        %1229 = vrot.lane.b32.xlu0 0.0, 112
        %v1230 = vpop.permute.xlu0 %1229
        %vm1231 = vcmp.lt.s32.totalorder %v269, 112
        %v1232 = vsel %vm1231, %v1228, %v1230
        %v1233 = vsel %vm1231, %v1226, %v1228
        %1234 = vrot.lane.b32.xlu0 %v245, 112
        %v1235 = vpop.permute.xlu0 %1234
        %1236 = vrot.lane.b32.xlu0 %v246, 112
        %v1237 = vpop.permute.xlu0 %1236
        %v1238 = vsel %vm1231, %v1237, %v1230
        %v1239 = vsel %vm1231, %v1235, %v1237
        %v1240 = vstv %s1223
        %v1241 = vmul.f32 %v1240, %v1233
        %v1242 = vmul.f32 %v1240, %v1232
        %v1243 = vstv %s1224
        %v1244 = vmul.f32 %v1243, %v1239
        %v1245 = vmul.f32 %v1243, %v1238
        %v1246 = vadd.f32 %v1241, %v1244
        %v1247 = vadd.f32 %v1242, %v1245
        %v1248 = vmul.f32 %v1246, %v411
        %v1249 = vmul.f32 %v1247, %v415
        %v1250 = vadd.f32 %v1221, %v1248
        %v1251 = vadd.f32 %v1222, %v1249
        %s1252 = sld [smem:[#allocation2 + $0x20]]
        %s1253 = sld [smem:[#allocation2 + $0x51]]
        %1254 = vrot.lane.b32.xlu0 %v223, 111
        %v1255 = vpop.permute.xlu0 %1254
        %1256 = vrot.lane.b32.xlu0 %v230, 111
        %v1257 = vpop.permute.xlu0 %1256
        %1258 = vrot.lane.b32.xlu0 0.0, 111
        %v1259 = vpop.permute.xlu0 %1258
        %vm1260 = vcmp.lt.s32.totalorder %v269, 111
        %v1261 = vsel %vm1260, %v1257, %v1259
        %v1262 = vsel %vm1260, %v1255, %v1257
        %1263 = vrot.lane.b32.xlu0 %v245, 111
        %v1264 = vpop.permute.xlu0 %1263
        %1265 = vrot.lane.b32.xlu0 %v246, 111
        %v1266 = vpop.permute.xlu0 %1265
        %v1267 = vsel %vm1260, %v1266, %v1259
        %v1268 = vsel %vm1260, %v1264, %v1266
        %v1269 = vstv %s1252
        %v1270 = vmul.f32 %v1269, %v1262
        %v1271 = vmul.f32 %v1269, %v1261
        %v1272 = vstv %s1253
        %v1273 = vmul.f32 %v1272, %v1268
        %v1274 = vmul.f32 %v1272, %v1267
        %v1275 = vadd.f32 %v1270, %v1273
        %v1276 = vadd.f32 %v1271, %v1274
        %v1277 = vmul.f32 %v1275, %v451
        %v1278 = vmul.f32 %v1276, %v455
        %v1279 = vadd.f32 %v1250, %v1277
        %v1280 = vadd.f32 %v1251, %v1278
        %s1281 = sld [smem:[#allocation2 + $0x21]]
        %s1282 = sld [smem:[#allocation2 + $0x52]]
        %1283 = vrot.lane.b32.xlu0 %v223, 110
        %v1284 = vpop.permute.xlu0 %1283
        %1285 = vrot.lane.b32.xlu0 %v230, 110
        %v1286 = vpop.permute.xlu0 %1285
        %1287 = vrot.lane.b32.xlu0 0.0, 110
        %v1288 = vpop.permute.xlu0 %1287
        %vm1289 = vcmp.lt.s32.totalorder %v269, 110
        %v1290 = vsel %vm1289, %v1286, %v1288
        %v1291 = vsel %vm1289, %v1284, %v1286
        %1292 = vrot.lane.b32.xlu0 %v245, 110
        %v1293 = vpop.permute.xlu0 %1292
        %1294 = vrot.lane.b32.xlu0 %v246, 110
        %v1295 = vpop.permute.xlu0 %1294
        %v1296 = vsel %vm1289, %v1295, %v1288
        %v1297 = vsel %vm1289, %v1293, %v1295
        %v1298 = vstv %s1281
        %v1299 = vmul.f32 %v1298, %v1291
        %v1300 = vmul.f32 %v1298, %v1290
        %v1301 = vstv %s1282
        %v1302 = vmul.f32 %v1301, %v1297
        %v1303 = vmul.f32 %v1301, %v1296
        %v1304 = vadd.f32 %v1299, %v1302
        %v1305 = vadd.f32 %v1300, %v1303
        %v1306 = vmul.f32 %v1304, %v491
        %v1307 = vmul.f32 %v1305, %v495
        %v1308 = vadd.f32 %v1279, %v1306
        %v1309 = vadd.f32 %v1280, %v1307
        %s1310 = sld [smem:[#allocation2 + $0x22]]
        %s1311 = sld [smem:[#allocation2 + $0x53]]
        %1312 = vrot.lane.b32.xlu0 %v223, 109
        %v1313 = vpop.permute.xlu0 %1312
        %1314 = vrot.lane.b32.xlu0 %v230, 109
        %v1315 = vpop.permute.xlu0 %1314
        %1316 = vrot.lane.b32.xlu0 0.0, 109
        %v1317 = vpop.permute.xlu0 %1316
        %vm1318 = vcmp.lt.s32.totalorder %v269, 109
        %v1319 = vsel %vm1318, %v1315, %v1317
        %v1320 = vsel %vm1318, %v1313, %v1315
        %1321 = vrot.lane.b32.xlu0 %v245, 109
        %v1322 = vpop.permute.xlu0 %1321
        %1323 = vrot.lane.b32.xlu0 %v246, 109
        %v1324 = vpop.permute.xlu0 %1323
        %v1325 = vsel %vm1318, %v1324, %v1317
        %v1326 = vsel %vm1318, %v1322, %v1324
        %v1327 = vstv %s1310
        %v1328 = vmul.f32 %v1327, %v1320
        %v1329 = vmul.f32 %v1327, %v1319
        %v1330 = vstv %s1311
        %v1331 = vmul.f32 %v1330, %v1326
        %v1332 = vmul.f32 %v1330, %v1325
        %v1333 = vadd.f32 %v1328, %v1331
        %v1334 = vadd.f32 %v1329, %v1332
        %v1335 = vmul.f32 %v1333, %v531
        %v1336 = vmul.f32 %v1334, %v535
        %v1337 = vadd.f32 %v1308, %v1335
        %v1338 = vadd.f32 %v1309, %v1336
        %s1339 = sld [smem:[#allocation2 + $0x23]]
        %s1340 = sld [smem:[#allocation2 + $0x54]]
        %1341 = vrot.lane.b32.xlu0 %v223, 99
        %v1342 = vpop.permute.xlu0 %1341
        %1343 = vrot.lane.b32.xlu0 %v230, 99
        %v1344 = vpop.permute.xlu0 %1343
        %1345 = vrot.lane.b32.xlu0 0.0, 99
        %v1346 = vpop.permute.xlu0 %1345
        %vm1347 = vcmp.lt.s32.totalorder %v269, 99
        %v1348 = vsel %vm1347, %v1344, %v1346
        %v1349 = vsel %vm1347, %v1342, %v1344
        %1350 = vrot.lane.b32.xlu0 %v245, 99
        %v1351 = vpop.permute.xlu0 %1350
        %1352 = vrot.lane.b32.xlu0 %v246, 99
        %v1353 = vpop.permute.xlu0 %1352
        %v1354 = vsel %vm1347, %v1353, %v1346
        %v1355 = vsel %vm1347, %v1351, %v1353
        %v1356 = vstv %s1339
        %v1357 = vmul.f32 %v1356, %v1349
        %v1358 = vmul.f32 %v1356, %v1348
        %v1359 = vstv %s1340
        %v1360 = vmul.f32 %v1359, %v1355
        %v1361 = vmul.f32 %v1359, %v1354
        %v1362 = vadd.f32 %v1357, %v1360
        %v1363 = vadd.f32 %v1358, %v1361
        %v1364 = vmul.f32 %v1362, %v291
        %v1365 = vmul.f32 %v1363, %v295
        %v1366 = vadd.f32 %v1337, %v1364
        %v1367 = vadd.f32 %v1338, %v1365
        %s1368 = sld [smem:[#allocation2 + $0x24]]
        %s1369 = sld [smem:[#allocation2 + $0x55]]
        %1370 = vrot.lane.b32.xlu0 %v223, 98
        %v1371 = vpop.permute.xlu0 %1370
        %1372 = vrot.lane.b32.xlu0 %v230, 98
        %v1373 = vpop.permute.xlu0 %1372
        %1374 = vrot.lane.b32.xlu0 0.0, 98
        %v1375 = vpop.permute.xlu0 %1374
        %vm1376 = vcmp.lt.s32.totalorder %v269, 98
        %v1377 = vsel %vm1376, %v1373, %v1375
        %v1378 = vsel %vm1376, %v1371, %v1373
        %1379 = vrot.lane.b32.xlu0 %v245, 98
        %v1380 = vpop.permute.xlu0 %1379
        %1381 = vrot.lane.b32.xlu0 %v246, 98
        %v1382 = vpop.permute.xlu0 %1381
        %v1383 = vsel %vm1376, %v1382, %v1375
        %v1384 = vsel %vm1376, %v1380, %v1382
        %v1385 = vstv %s1368
        %v1386 = vmul.f32 %v1385, %v1378
        %v1387 = vmul.f32 %v1385, %v1377
        %v1388 = vstv %s1369
        %v1389 = vmul.f32 %v1388, %v1384
        %v1390 = vmul.f32 %v1388, %v1383
        %v1391 = vadd.f32 %v1386, %v1389
        %v1392 = vadd.f32 %v1387, %v1390
        %v1393 = vmul.f32 %v1391, %v331
        %v1394 = vmul.f32 %v1392, %v335
        %v1395 = vadd.f32 %v1366, %v1393
        %v1396 = vadd.f32 %v1367, %v1394
        %s1397 = sld [smem:[#allocation2 + $0x25]]
        %s1398 = sld [smem:[#allocation2 + $0x56]]
        %1399 = vrot.lane.b32.xlu0 %v223, 97
        %v1400 = vpop.permute.xlu0 %1399
        %1401 = vrot.lane.b32.xlu0 %v230, 97
        %v1402 = vpop.permute.xlu0 %1401
        %1403 = vrot.lane.b32.xlu0 0.0, 97
        %v1404 = vpop.permute.xlu0 %1403
        %vm1405 = vcmp.lt.s32.totalorder %v269, 97
        %v1406 = vsel %vm1405, %v1402, %v1404
        %v1407 = vsel %vm1405, %v1400, %v1402
        %1408 = vrot.lane.b32.xlu0 %v245, 97
        %v1409 = vpop.permute.xlu0 %1408
        %1410 = vrot.lane.b32.xlu0 %v246, 97
        %v1411 = vpop.permute.xlu0 %1410
        %v1412 = vsel %vm1405, %v1411, %v1404
        %v1413 = vsel %vm1405, %v1409, %v1411
        %v1414 = vstv %s1397
        %v1415 = vmul.f32 %v1414, %v1407
        %v1416 = vmul.f32 %v1414, %v1406
        %v1417 = vstv %s1398
        %v1418 = vmul.f32 %v1417, %v1413
        %v1419 = vmul.f32 %v1417, %v1412
        %v1420 = vadd.f32 %v1415, %v1418
        %v1421 = vadd.f32 %v1416, %v1419
        %v1422 = vmul.f32 %v1420, %v371
        %v1423 = vmul.f32 %v1421, %v375
        %v1424 = vadd.f32 %v1395, %v1422
        %v1425 = vadd.f32 %v1396, %v1423
        %s1426 = sld [smem:[#allocation2 + $0x26]]
        %s1427 = sld [smem:[#allocation2 + $0x57]]
        %1428 = vrot.lane.b32.xlu0 %v223, 96
        %v1429 = vpop.permute.xlu0 %1428
        %1430 = vrot.lane.b32.xlu0 %v230, 96
        %v1431 = vpop.permute.xlu0 %1430
        %1432 = vrot.lane.b32.xlu0 0.0, 96
        %v1433 = vpop.permute.xlu0 %1432
        %vm1434 = vcmp.lt.s32.totalorder %v269, 96
        %v1435 = vsel %vm1434, %v1431, %v1433
        %v1436 = vsel %vm1434, %v1429, %v1431
        %1437 = vrot.lane.b32.xlu0 %v245, 96
        %v1438 = vpop.permute.xlu0 %1437
        %1439 = vrot.lane.b32.xlu0 %v246, 96
        %v1440 = vpop.permute.xlu0 %1439
        %v1441 = vsel %vm1434, %v1440, %v1433
        %v1442 = vsel %vm1434, %v1438, %v1440
        %v1443 = vstv %s1426
        %v1444 = vmul.f32 %v1443, %v1436
        %v1445 = vmul.f32 %v1443, %v1435
        %v1446 = vstv %s1427
        %v1447 = vmul.f32 %v1446, %v1442
        %v1448 = vmul.f32 %v1446, %v1441
        %v1449 = vadd.f32 %v1444, %v1447
        %v1450 = vadd.f32 %v1445, %v1448
        %v1451 = vmul.f32 %v1449, %v411
        %v1452 = vmul.f32 %v1450, %v415
        %v1453 = vadd.f32 %v1424, %v1451
        %v1454 = vadd.f32 %v1425, %v1452
        %s1455 = sld [smem:[#allocation2 + $0x27]]
        %s1456 = sld [smem:[#allocation2 + $0x58]]
        %1457 = vrot.lane.b32.xlu0 %v223, 95
        %v1458 = vpop.permute.xlu0 %1457
        %1459 = vrot.lane.b32.xlu0 %v230, 95
        %v1460 = vpop.permute.xlu0 %1459
        %1461 = vrot.lane.b32.xlu0 0.0, 95
        %v1462 = vpop.permute.xlu0 %1461
        %vm1463 = vcmp.lt.s32.totalorder %v269, 95
        %v1464 = vsel %vm1463, %v1460, %v1462
        %v1465 = vsel %vm1463, %v1458, %v1460
        %1466 = vrot.lane.b32.xlu0 %v245, 95
        %v1467 = vpop.permute.xlu0 %1466
        %1468 = vrot.lane.b32.xlu0 %v246, 95
        %v1469 = vpop.permute.xlu0 %1468
        %v1470 = vsel %vm1463, %v1469, %v1462
        %v1471 = vsel %vm1463, %v1467, %v1469
        %v1472 = vstv %s1455
        %v1473 = vmul.f32 %v1472, %v1465
        %v1474 = vmul.f32 %v1472, %v1464
        %v1475 = vstv %s1456
        %v1476 = vmul.f32 %v1475, %v1471
        %v1477 = vmul.f32 %v1475, %v1470
        %v1478 = vadd.f32 %v1473, %v1476
        %v1479 = vadd.f32 %v1474, %v1477
        %v1480 = vmul.f32 %v1478, %v451
        %v1481 = vmul.f32 %v1479, %v455
        %v1482 = vadd.f32 %v1453, %v1480
        %v1483 = vadd.f32 %v1454, %v1481
        %s1484 = sld [smem:[#allocation2 + $0x28]]
        %s1485 = sld [smem:[#allocation2 + $0x59]]
        %1486 = vrot.lane.b32.xlu0 %v223, 94
        %v1487 = vpop.permute.xlu0 %1486
        %1488 = vrot.lane.b32.xlu0 %v230, 94
        %v1489 = vpop.permute.xlu0 %1488
        %1490 = vrot.lane.b32.xlu0 0.0, 94
        %v1491 = vpop.permute.xlu0 %1490
        %vm1492 = vcmp.lt.s32.totalorder %v269, 94
        %v1493 = vsel %vm1492, %v1489, %v1491
        %v1494 = vsel %vm1492, %v1487, %v1489
        %1495 = vrot.lane.b32.xlu0 %v245, 94
        %v1496 = vpop.permute.xlu0 %1495
        %1497 = vrot.lane.b32.xlu0 %v246, 94
        %v1498 = vpop.permute.xlu0 %1497
        %v1499 = vsel %vm1492, %v1498, %v1491
        %v1500 = vsel %vm1492, %v1496, %v1498
        %v1501 = vstv %s1484
        %v1502 = vmul.f32 %v1501, %v1494
        %v1503 = vmul.f32 %v1501, %v1493
        %v1504 = vstv %s1485
        %v1505 = vmul.f32 %v1504, %v1500
        %v1506 = vmul.f32 %v1504, %v1499
        %v1507 = vadd.f32 %v1502, %v1505
        %v1508 = vadd.f32 %v1503, %v1506
        %v1509 = vmul.f32 %v1507, %v491
        %v1510 = vmul.f32 %v1508, %v495
        %v1511 = vadd.f32 %v1482, %v1509
        %v1512 = vadd.f32 %v1483, %v1510
        %s1513 = sld [smem:[#allocation2 + $0x29]]
        %s1514 = sld [smem:[#allocation2 + $0x5a]]
        %1515 = vrot.lane.b32.xlu0 %v223, 93
        %v1516 = vpop.permute.xlu0 %1515
        %1517 = vrot.lane.b32.xlu0 %v230, 93
        %v1518 = vpop.permute.xlu0 %1517
        %1519 = vrot.lane.b32.xlu0 0.0, 93
        %v1520 = vpop.permute.xlu0 %1519
        %vm1521 = vcmp.lt.s32.totalorder %v269, 93
        %v1522 = vsel %vm1521, %v1518, %v1520
        %v1523 = vsel %vm1521, %v1516, %v1518
        %1524 = vrot.lane.b32.xlu0 %v245, 93
        %v1525 = vpop.permute.xlu0 %1524
        %1526 = vrot.lane.b32.xlu0 %v246, 93
        %v1527 = vpop.permute.xlu0 %1526
        %v1528 = vsel %vm1521, %v1527, %v1520
        %v1529 = vsel %vm1521, %v1525, %v1527
        %v1530 = vstv %s1513
        %v1531 = vmul.f32 %v1530, %v1523
        %v1532 = vmul.f32 %v1530, %v1522
        %v1533 = vstv %s1514
        %v1534 = vmul.f32 %v1533, %v1529
        %v1535 = vmul.f32 %v1533, %v1528
        %v1536 = vadd.f32 %v1531, %v1534
        %v1537 = vadd.f32 %v1532, %v1535
        %v1538 = vmul.f32 %v1536, %v531
        %v1539 = vmul.f32 %v1537, %v535
        %v1540 = vadd.f32 %v1511, %v1538
        %v1541 = vadd.f32 %v1512, %v1539
        %s1542 = sld [smem:[#allocation2 + $0x2a]]
        %s1543 = sld [smem:[#allocation2 + $0x5b]]
        %1544 = vrot.lane.b32.xlu0 %v223, 83
        %v1545 = vpop.permute.xlu0 %1544
        %1546 = vrot.lane.b32.xlu0 %v230, 83
        %v1547 = vpop.permute.xlu0 %1546
        %1548 = vrot.lane.b32.xlu0 0.0, 83
        %v1549 = vpop.permute.xlu0 %1548
        %vm1550 = vcmp.lt.s32.totalorder %v269, 83
        %v1551 = vsel %vm1550, %v1547, %v1549
        %v1552 = vsel %vm1550, %v1545, %v1547
        %1553 = vrot.lane.b32.xlu0 %v245, 83
        %v1554 = vpop.permute.xlu0 %1553
        %1555 = vrot.lane.b32.xlu0 %v246, 83
        %v1556 = vpop.permute.xlu0 %1555
        %v1557 = vsel %vm1550, %v1556, %v1549
        %v1558 = vsel %vm1550, %v1554, %v1556
        %v1559 = vstv %s1542
        %v1560 = vmul.f32 %v1559, %v1552
        %v1561 = vmul.f32 %v1559, %v1551
        %v1562 = vstv %s1543
        %v1563 = vmul.f32 %v1562, %v1558
        %v1564 = vmul.f32 %v1562, %v1557
        %v1565 = vadd.f32 %v1560, %v1563
        %v1566 = vadd.f32 %v1561, %v1564
        %v1567 = vmul.f32 %v1565, %v291
        %v1568 = vmul.f32 %v1566, %v295
        %v1569 = vadd.f32 %v1540, %v1567
        %v1570 = vadd.f32 %v1541, %v1568
        %s1571 = sld [smem:[#allocation2 + $0x2b]]
        %s1572 = sld [smem:[#allocation2 + $0x5c]]
        %1573 = vrot.lane.b32.xlu0 %v223, 82
        %v1574 = vpop.permute.xlu0 %1573
        %1575 = vrot.lane.b32.xlu0 %v230, 82
        %v1576 = vpop.permute.xlu0 %1575
        %1577 = vrot.lane.b32.xlu0 0.0, 82
        %v1578 = vpop.permute.xlu0 %1577
        %vm1579 = vcmp.lt.s32.totalorder %v269, 82
        %v1580 = vsel %vm1579, %v1576, %v1578
        %v1581 = vsel %vm1579, %v1574, %v1576
        %1582 = vrot.lane.b32.xlu0 %v245, 82
        %v1583 = vpop.permute.xlu0 %1582
        %1584 = vrot.lane.b32.xlu0 %v246, 82
        %v1585 = vpop.permute.xlu0 %1584
        %v1586 = vsel %vm1579, %v1585, %v1578
        %v1587 = vsel %vm1579, %v1583, %v1585
        %v1588 = vstv %s1571
        %v1589 = vmul.f32 %v1588, %v1581
        %v1590 = vmul.f32 %v1588, %v1580
        %v1591 = vstv %s1572
        %v1592 = vmul.f32 %v1591, %v1587
        %v1593 = vmul.f32 %v1591, %v1586
        %v1594 = vadd.f32 %v1589, %v1592
        %v1595 = vadd.f32 %v1590, %v1593
        %v1596 = vmul.f32 %v1594, %v331
        %v1597 = vmul.f32 %v1595, %v335
        %v1598 = vadd.f32 %v1569, %v1596
        %v1599 = vadd.f32 %v1570, %v1597
        %s1600 = sld [smem:[#allocation2 + $0x2c]]
        %s1601 = sld [smem:[#allocation2 + $0x5d]]
        %1602 = vrot.lane.b32.xlu0 %v223, 81
        %v1603 = vpop.permute.xlu0 %1602
        %1604 = vrot.lane.b32.xlu0 %v230, 81
        %v1605 = vpop.permute.xlu0 %1604
        %1606 = vrot.lane.b32.xlu0 0.0, 81
        %v1607 = vpop.permute.xlu0 %1606
        %vm1608 = vcmp.lt.s32.totalorder %v269, 81
        %v1609 = vsel %vm1608, %v1605, %v1607
        %v1610 = vsel %vm1608, %v1603, %v1605
        %1611 = vrot.lane.b32.xlu0 %v245, 81
        %v1612 = vpop.permute.xlu0 %1611
        %1613 = vrot.lane.b32.xlu0 %v246, 81
        %v1614 = vpop.permute.xlu0 %1613
        %v1615 = vsel %vm1608, %v1614, %v1607
        %v1616 = vsel %vm1608, %v1612, %v1614
        %v1617 = vstv %s1600
        %v1618 = vmul.f32 %v1617, %v1610
        %v1619 = vmul.f32 %v1617, %v1609
        %v1620 = vstv %s1601
        %v1621 = vmul.f32 %v1620, %v1616
        %v1622 = vmul.f32 %v1620, %v1615
        %v1623 = vadd.f32 %v1618, %v1621
        %v1624 = vadd.f32 %v1619, %v1622
        %v1625 = vmul.f32 %v1623, %v371
        %v1626 = vmul.f32 %v1624, %v375
        %v1627 = vadd.f32 %v1598, %v1625
        %v1628 = vadd.f32 %v1599, %v1626
        %s1629 = sld [smem:[#allocation2 + $0x2d]]
        %s1630 = sld [smem:[#allocation2 + $0x5e]]
        %1631 = vrot.lane.b32.xlu0 %v223, 80
        %v1632 = vpop.permute.xlu0 %1631
        %1633 = vrot.lane.b32.xlu0 %v230, 80
        %v1634 = vpop.permute.xlu0 %1633
        %1635 = vrot.lane.b32.xlu0 0.0, 80
        %v1636 = vpop.permute.xlu0 %1635
        %vm1637 = vcmp.lt.s32.totalorder %v269, 80
        %v1638 = vsel %vm1637, %v1634, %v1636
        %v1639 = vsel %vm1637, %v1632, %v1634
        %1640 = vrot.lane.b32.xlu0 %v245, 80
        %v1641 = vpop.permute.xlu0 %1640
        %1642 = vrot.lane.b32.xlu0 %v246, 80
        %v1643 = vpop.permute.xlu0 %1642
        %v1644 = vsel %vm1637, %v1643, %v1636
        %v1645 = vsel %vm1637, %v1641, %v1643
        %v1646 = vstv %s1629
        %v1647 = vmul.f32 %v1646, %v1639
        %v1648 = vmul.f32 %v1646, %v1638
        %v1649 = vstv %s1630
        %v1650 = vmul.f32 %v1649, %v1645
        %v1651 = vmul.f32 %v1649, %v1644
        %v1652 = vadd.f32 %v1647, %v1650
        %v1653 = vadd.f32 %v1648, %v1651
        %v1654 = vmul.f32 %v1652, %v411
        %v1655 = vmul.f32 %v1653, %v415
        %v1656 = vadd.f32 %v1627, %v1654
        %v1657 = vadd.f32 %v1628, %v1655
        %s1658 = sld [smem:[#allocation2 + $0x2e]]
        %s1659 = sld [smem:[#allocation2 + $0x5f]]
        %1660 = vrot.lane.b32.xlu0 %v223, 79
        %v1661 = vpop.permute.xlu0 %1660
        %1662 = vrot.lane.b32.xlu0 %v230, 79
        %v1663 = vpop.permute.xlu0 %1662
        %1664 = vrot.lane.b32.xlu0 0.0, 79
        %v1665 = vpop.permute.xlu0 %1664
        %vm1666 = vcmp.lt.s32.totalorder %v269, 79
        %v1667 = vsel %vm1666, %v1663, %v1665
        %v1668 = vsel %vm1666, %v1661, %v1663
        %1669 = vrot.lane.b32.xlu0 %v245, 79
        %v1670 = vpop.permute.xlu0 %1669
        %1671 = vrot.lane.b32.xlu0 %v246, 79
        %v1672 = vpop.permute.xlu0 %1671
        %v1673 = vsel %vm1666, %v1672, %v1665
        %v1674 = vsel %vm1666, %v1670, %v1672
        %v1675 = vstv %s1658
        %v1676 = vmul.f32 %v1675, %v1668
        %v1677 = vmul.f32 %v1675, %v1667
        %v1678 = vstv %s1659
        %v1679 = vmul.f32 %v1678, %v1674
        %v1680 = vmul.f32 %v1678, %v1673
        %v1681 = vadd.f32 %v1676, %v1679
        %v1682 = vadd.f32 %v1677, %v1680
        %v1683 = vmul.f32 %v1681, %v451
        %v1684 = vmul.f32 %v1682, %v455
        %v1685 = vadd.f32 %v1656, %v1683
        %v1686 = vadd.f32 %v1657, %v1684
        %s1687 = sld [smem:[#allocation2 + $0x2f]]
        %s1688 = sld [smem:[#allocation2 + $0x60]]
        %1689 = vrot.lane.b32.xlu0 %v223, 78
        %v1690 = vpop.permute.xlu0 %1689
        %1691 = vrot.lane.b32.xlu0 %v230, 78
        %v1692 = vpop.permute.xlu0 %1691
        %1693 = vrot.lane.b32.xlu0 0.0, 78
        %v1694 = vpop.permute.xlu0 %1693
        %vm1695 = vcmp.lt.s32.totalorder %v269, 78
        %v1696 = vsel %vm1695, %v1692, %v1694
        %v1697 = vsel %vm1695, %v1690, %v1692
        %1698 = vrot.lane.b32.xlu0 %v245, 78
        %v1699 = vpop.permute.xlu0 %1698
        %1700 = vrot.lane.b32.xlu0 %v246, 78
        %v1701 = vpop.permute.xlu0 %1700
        %v1702 = vsel %vm1695, %v1701, %v1694
        %v1703 = vsel %vm1695, %v1699, %v1701
        %v1704 = vstv %s1687
        %v1705 = vmul.f32 %v1704, %v1697
        %v1706 = vmul.f32 %v1704, %v1696
        %v1707 = vstv %s1688
        %v1708 = vmul.f32 %v1707, %v1703
        %v1709 = vmul.f32 %v1707, %v1702
        %v1710 = vadd.f32 %v1705, %v1708
        %v1711 = vadd.f32 %v1706, %v1709
        %v1712 = vmul.f32 %v1710, %v491
        %v1713 = vmul.f32 %v1711, %v495
        %v1714 = vadd.f32 %v1685, %v1712
        %v1715 = vadd.f32 %v1686, %v1713
        %s1716 = sld [smem:[#allocation2 + $0x30]]
        %s1717 = sld [smem:[#allocation2 + $0x61]]
        %1718 = vrot.lane.b32.xlu0 %v223, 77
        %v1719 = vpop.permute.xlu0 %1718
        %1720 = vrot.lane.b32.xlu0 %v230, 77
        %v1721 = vpop.permute.xlu0 %1720
        %1722 = vrot.lane.b32.xlu0 0.0, 77
        %v1723 = vpop.permute.xlu0 %1722
        %vm1724 = vcmp.lt.s32.totalorder %v269, 77
        %v1725 = vsel %vm1724, %v1721, %v1723
        %v1726 = vsel %vm1724, %v1719, %v1721
        %1727 = vrot.lane.b32.xlu0 %v245, 77
        %v1728 = vpop.permute.xlu0 %1727
        %1729 = vrot.lane.b32.xlu0 %v246, 77
        %v1730 = vpop.permute.xlu0 %1729
        %v1731 = vsel %vm1724, %v1730, %v1723
        %v1732 = vsel %vm1724, %v1728, %v1730
        %v1733 = vstv %s1716
        %v1734 = vmul.f32 %v1733, %v1726
        %v1735 = vmul.f32 %v1733, %v1725
        %v1736 = vstv %s1717
        %v1737 = vmul.f32 %v1736, %v1732
        %v1738 = vmul.f32 %v1736, %v1731
        %v1739 = vadd.f32 %v1734, %v1737
        %v1740 = vadd.f32 %v1735, %v1738
        %v1741 = vmul.f32 %v1739, %v531
        %v1742 = vmul.f32 %v1740, %v535
        %v1743 = vadd.f32 %v1714, %v1741
        %v1744 = vadd.f32 %v1715, %v1742
        %v1745 = vxor.u32 %v1743, 2147483648
        %v1746 = vxor.u32 %v1744, 2147483648
        %v1747 = vmul.f32 %v1745, 1.442695
        %v1748 = vpow.pop %v1747
        %v1749 = vmul.f32 %v1746, 1.442695
        %v1750 = vpow.pop %v1749
        %v1751 = vadd.f32 %v1748, 1.0
        %v1752 = vadd.f32 %v1750, 1.0
        %v1753 = vrcp.pop %v1751
        %v1754 = vmul.f32 1.0, %v1753
        %v1755 = vrcp.pop %v1752
        %v1756 = vmul.f32 1.0, %v1755
        %v1757 = vlaneseq
        %v1758 = vshrl.u32 %v1757, 7
        %v1759 = vsub.s32 0, %v1758
        %v1760 = vrot.slane %v1754, %v1759
        %v1761 = vlaneseq
        %v1762 = vshrl.u32 %v1761, 7
        %v1763 = vsub.s32 0, %v1762
        %v1764 = vrot.slane %v1756, %v1763
        %v1767 = vcombine.low %v1760, %v1764
        %v1769 = vmul.f32 %v212, %v1767
        %1770 = vst [vmem:[%s211] sm:$0xff] %v1769
        %s1771 = sand.u32 %s98, 1
        %s1772 = scalar_lea.sflag [#allocation4], %s1771
        %s1773 = sand.u32 %s98, 1
        %s1774 = smul.addr %s1773, 8
        %s1775 = scalar_lea.vmem [#allocation9], %s1774
        // Predicated region
        $region45: #{tpu_custom_call.1} parent=31 // pred_check
          %p1776 = pneg %p108
        $region46: #{tpu_custom_call.1} parent=31 // pred_check_branch
          %1778 = sbr.rel (%p1776) target = $region48
        $region47: #{tpu_custom_call.1} parent=31 // pred_region
          %s1780 = ssub.s32 128, 128
          %1781 = vsyncadd %s1772, %s1780
          %s1782 = smul.addr %s22, 2
          %s1783 = smul.addr %s1782, 64
          %s1784 = scalar_lea.hbm %s3, %s1783
          %s1786 = sshll.u32 %s1775, 4
          %s1787 = int_to_ptr.vmem [resolvable:$true] %s1786
          %1789 = dma.vmem_to_hbm [thread:$0]  %s1787, 128, %s1784, %s1772
        $region48: #{tpu_custom_call.1} parent=31 // pred_fallthru
          _
      $region32: #{tpu_custom_call.1} parent=5 // pred_fallthru
        _
      %p1790 = scmp.le.s32.totalorder 2, %s17
      // Predicated region
      $region49: #{tpu_custom_call.1} parent=5 // pred_check
        %p1791 = pneg %p1790
      $region50: #{tpu_custom_call.1} parent=5 // pred_check_branch
        %1793 = sbr.rel (%p1791) target = $region52
      $region51: #{tpu_custom_call.1} parent=5 // pred_region
        %s1794 = ssub.s32 %s17, 2
        // Predicated region
        $region53: #{tpu_custom_call.1} parent=51 // pred_check
          %p1795 = pneg %p114
        $region54: #{tpu_custom_call.1} parent=51 // pred_check_branch
          %1797 = sbr.rel (%p1795) target = $region56
        $region55: #{tpu_custom_call.1} parent=51 // pred_region
          %s1798 = sand.u32 %s99, 1
          %s1799 = scalar_lea.sflag [#allocation4], %s1798
          %s1800 = sand.u32 %s99, 1
          %s1801 = smul.addr %s1800, 8
          %s1802 = scalar_lea.vmem [#allocation9], %s1801
          %1803 = dma.done %s1799, 128
        $region56: #{tpu_custom_call.1} parent=51 // pred_fallthru
          _
      $region52: #{tpu_custom_call.1} parent=5 // pred_fallthru
        _
    $region6: #{tpu_custom_call.1} parent=1 // loop_footer
      %s21 = sadd.s32 1, %s17
    $region7: #{tpu_custom_call.1} parent=1 // loop_footer_branch
      %16 = sbr.rel target = $region3
    $region8: #{tpu_custom_call.1} parent=1 // loop_exit
      _
    %1804 = vsyncpa [#allocation3], 1
    %s1805 = scalar_lea.sflag [#allocation3], 1
    %1806 = vsyncpa %s1805, 1
    %1807 = vsyncpa [#allocation8], 1
    %s1808 = scalar_lea.sflag [#allocation8], 1
    %1809 = vsyncpa %s1808, 1
    %1810 = vsyncpa [#allocation4], 1
    %s1811 = scalar_lea.sflag [#allocation4], 1
    %1812 = vsyncpa %s1811, 1
    %1813 = vsyncpa [#allocation5], 1
    %s1814 = scalar_lea.sflag [#allocation5], 1
    %1815 = vsyncpa %s1814, 1

</llo_original>
